<compile_context>
chip_gen: v7x
topology: tpu7x:2x2x1
jax: 0.10.0
libtpu: 0.0.40
codegen_flags: <defaults>
</compile_context>

<pallas_src>
import jax
import jax.numpy as jnp
from jax.experimental import pallas as pl
from jax.experimental.pallas import tpu as pltpu

IN_FEATURES = 2680
HID1 = 32
HID2 = 8
OUT = 1


def _round_up(v, m):
    return (v + m - 1) // m * m


def _mlp_kernel(x_ref, w1_ref, b1_ref, w2t_ref, b2c_ref, w3c_ref, b3_ref, o_ref):
    # Layer 1 (MXU): (TM, 2680) @ (2680, 32) + (1, 32), ReLU.
    h1 = jnp.dot(x_ref[...], w1_ref[...], preferred_element_type=jnp.float32)
    h1 = jnp.maximum(h1 + b1_ref[...], 0.0)                       # (TM, 32)

    # Re-orient rows onto the lane axis so the rest of the pipeline (and the
    # final store) is lane-dense. XLU transpose; kernel is DMA-bound so free.
    h1t = h1.T                                                    # (32, TM)

    # Layer 2 (MXU): (8, 32) @ (32, TM) + (8, 1), ReLU.
    h2t = jnp.dot(w2t_ref[...], h1t, preferred_element_type=jnp.float32)
    h2t = jnp.maximum(h2t + b2c_ref[...], 0.0)                    # (8, TM)

    # Layer 3: N=1 -> VPU multiply + sublane reduction instead of an MXU dot.
    logits = jnp.sum(h2t * w3c_ref[...], axis=0, keepdims=True) + b3_ref[...]  # (1, TM)

    # Sigmoid (EUP exp + reciprocal), stored as an unmasked lane-dense row.
    o_ref[...] = 1.0 / (1.0 + jnp.exp(-logits))


def classifier_forward(x, params, *, tm=1024):
    """x: (B, C, *spatial) with prod(spatial) == 2680. Returns (B, C, 1) f32.

    params are in PyTorch nn.Linear layout: (W1(32,2680), b1(32,), W2(8,32),
    b2(8,), W3(1,8), b3(1,)).
    """
    b, c = x.shape[0], x.shape[1]
    x2d = x.reshape(b * c, -1)
    if not jnp.issubdtype(x2d.dtype, jnp.floating):
        x2d = x2d.astype(jnp.float32)      # keep native f32/bf16 otherwise
    m, k = x2d.shape
    assert k == IN_FEATURES, f"expected {IN_FEATURES} flattened features, got {k}"

    w1, b1, w2, b2, w3, b3 = params
    # Tiny, one-off re-layouts (<< the x read); weights become VMEM-resident.
    w1t = jnp.transpose(w1).astype(jnp.float32)        # (2680, 32)
    b1r = b1.reshape(1, HID1).astype(jnp.float32)      # (1, 32)
    w2t = w2.astype(jnp.float32)                       # (8, 32)  (out, in) as-is
    b2c = b2.reshape(HID2, 1).astype(jnp.float32)      # (8, 1)
    w3c = w3.reshape(HID2, 1).astype(jnp.float32)      # (8, 1)
    b3r = b3.reshape(1, 1).astype(jnp.float32)         # (1, 1)

    # Row tile: single full-extent tile for small M (block == array dims),
    # otherwise a lane-friendly multiple of 128; last tile may be ragged.
    if m <= tm:
        tile = m
    else:
        tile = _round_up(min(tm, m), 128)
    num_tiles = pl.cdiv(m, tile)

    const = lambda r, c_: pl.BlockSpec((r, c_), lambda i: (0, 0))

    out = pl.pallas_call(
        _mlp_kernel,
        out_shape=jax.ShapeDtypeStruct((1, num_tiles * tile), jnp.float32),
        grid=(num_tiles,),
        in_specs=[
            pl.BlockSpec((tile, IN_FEATURES), lambda i: (i, 0)),  # x: tiled over M
            const(IN_FEATURES, HID1),                              # weights/biases:
            const(1, HID1),                                        #   VMEM-resident
            const(HID2, HID1),
            const(HID2, 1),
            const(HID2, 1),
            const(1, 1),
        ],
        out_specs=pl.BlockSpec((1, tile), lambda i: (0, i)),       # lane-dense out
        compiler_params=pltpu.CompilerParams(
            dimension_semantics=("parallel",),   # row tiles independent (v7x 2-TC)
            vmem_limit_bytes=48 * 1024 * 1024,   # ~22 MiB footprint + headroom
        ),
    )(x2d, w1t, b1r, w2t, b2c, w3c, b3r)

    # Drop the padded tail of the ragged last tile and restore (B, C, 1).
    return out[0, :m].reshape(b, c, OUT)


def init_params(key):
    """Deterministic init mimicking torch.nn.Linear defaults
    (uniform(-1/sqrt(fan_in), 1/sqrt(fan_in))), stored in PyTorch layout."""
    def linear(key, fan_in, fan_out):
        kw, kb = jax.random.split(key)
        bound = 1.0 / jnp.sqrt(jnp.float32(fan_in))
        w = jax.random.uniform(kw, (fan_out, fan_in), jnp.float32, -bound, bound)
        b = jax.random.uniform(kb, (fan_out,), jnp.float32, -bound, bound)
        return w, b

    k1, k2, k3 = jax.random.split(key, 3)
    w1, b1 = linear(k1, IN_FEATURES, HID1)
    w2, b2 = linear(k2, HID1, HID2)
    w3, b3 = linear(k3, HID2, OUT)
    return (w1, b1, w2, b2, w3, b3)


def _reference(x, params):
    w1, b1, w2, b2, w3, b3 = params
    b, c = x.shape[0], x.shape[1]
    xf = x.reshape(b * c, -1).astype(jnp.float32)
    h = jnp.maximum(xf @ w1.T + b1, 0.0)
    h = jnp.maximum(h @ w2.T + b2, 0.0)
    return (1.0 / (1.0 + jnp.exp(-(h @ w3.T + b3)))).reshape(b, c, 1)


if __name__ == "__main__":
    key = jax.random.PRNGKey(0)
    kparams, kx1, kx2 = jax.random.split(key, 3)
    params = init_params(kparams)

    # Case 1: small input consistent with the forward: (B, C, H, W), H*W == 2680.
    B, C, H, W = 2, 4, 67, 40
    x1 = jax.random.normal(kx1, (B, C, H, W), jnp.float32)
    out1 = jax.block_until_ready(classifier_forward(x1, params))
    ref1 = _reference(x1, params)
    assert out1.shape == (B, C, 1), out1.shape
    assert jnp.allclose(out1, ref1, atol=1e-5, rtol=1e-5), (
        float(jnp.max(jnp.abs(out1 - ref1)))
    )

    # Case 2: M=150 rows with a small tile to exercise the multi-tile grid,
    # the ragged (unpadded) last block, and the lane-dense output path.
    B2, C2 = 5, 30
    x2 = jax.random.normal(kx2, (B2, C2, H, W), jnp.float32)
    out2 = jax.block_until_ready(classifier_forward(x2, params, tm=128))
    ref2 = _reference(x2, params)
    assert out2.shape == (B2, C2, 1), out2.shape
    assert jnp.allclose(out2, ref2, atol=1e-5, rtol=1e-5), (
        float(jnp.max(jnp.abs(out2 - ref2)))
    )

    print("KERNEL_OK")
</pallas_src>

<mosaic_0001>
module attributes {stable_mosaic.version = 11 : i64} {
  func.func @_mlp_kernel(%arg0: i32, %arg1: memref<8x2680xf32, #tpu.memory_space<vmem>>, %arg2: memref<2680x32xf32, #tpu.memory_space<vmem>>, %arg3: memref<1x32xf32, #tpu.memory_space<vmem>>, %arg4: memref<8x32xf32, #tpu.memory_space<vmem>>, %arg5: memref<8x1xf32, #tpu.memory_space<vmem>>, %arg6: memref<8x1xf32, #tpu.memory_space<vmem>>, %arg7: memref<1x1xf32, #tpu.memory_space<vmem>>, %arg8: memref<1x8xf32, #tpu.memory_space<vmem>>) attributes {dimension_semantics = [#tpu.dimension_semantics<parallel>], iteration_bounds = array<i64: 1>, scalar_prefetch = 0 : i64, scratch_operands = 0 : i64, tpu.core_type = #tpu.core_type<tc>, window_params = [{transform_indices = @transform_0, window_bounds = array<i64: 8, 2680>}, {pipeline_mode = #tpu.pipeline_mode<synchronous>, transform_indices = @transform_1, window_bounds = array<i64: 2680, 32>}, {pipeline_mode = #tpu.pipeline_mode<synchronous>, transform_indices = @transform_2, window_bounds = array<i64: 1, 32>}, {pipeline_mode = #tpu.pipeline_mode<synchronous>, transform_indices = @transform_3, window_bounds = array<i64: 8, 32>}, {pipeline_mode = #tpu.pipeline_mode<synchronous>, transform_indices = @transform_4, window_bounds = array<i64: 8, 1>}, {pipeline_mode = #tpu.pipeline_mode<synchronous>, transform_indices = @transform_5, window_bounds = array<i64: 8, 1>}, {pipeline_mode = #tpu.pipeline_mode<synchronous>, transform_indices = @transform_6, window_bounds = array<i64: 1, 1>}, {transform_indices = @transform_7, window_bounds = array<i64: 1, 8>}]} {
    %c0 = arith.constant 0 : index
    %c0_0 = arith.constant 0 : index
    %0 = vector.load %arg1[%c0, %c0_0] : memref<8x2680xf32, #tpu.memory_space<vmem>>, vector<8x2680xf32>
    %c0_1 = arith.constant 0 : index
    %c0_2 = arith.constant 0 : index
    %1 = vector.load %arg2[%c0_1, %c0_2] : memref<2680x32xf32, #tpu.memory_space<vmem>>, vector<2680x32xf32>
    %cst = arith.constant dense<0.000000e+00> : vector<8x32xf32>
    %2 = tpu.matmul %0, %1, %cst {dimension_numbers = #tpu.dot_dimension_numbers<[1], [0], [0], [1], [0, 0, 1, 1], [], []>} : vector<8x2680xf32>, vector<2680x32xf32>, vector<8x32xf32> -> vector<8x32xf32>
    %c0_3 = arith.constant 0 : index
    %c0_4 = arith.constant 0 : index
    %3 = vector.load %arg3[%c0_3, %c0_4] : memref<1x32xf32, #tpu.memory_space<vmem>>, vector<1x32xf32>
    %4 = vector.broadcast %3 : vector<1x32xf32> to vector<8x32xf32>
    %5 = arith.addf %2, %4 : vector<8x32xf32>
    %cst_5 = arith.constant 0.000000e+00 : f32
    %6 = vector.broadcast %cst_5 : f32 to vector<8x32xf32>
    %7 = arith.maximumf %5, %6 : vector<8x32xf32>
    %8 = tpu.transpose %7, [1, 0] : vector<8x32xf32> -> vector<32x8xf32>
    %c0_6 = arith.constant 0 : index
    %c0_7 = arith.constant 0 : index
    %9 = vector.load %arg4[%c0_6, %c0_7] : memref<8x32xf32, #tpu.memory_space<vmem>>, vector<8x32xf32>
    %cst_8 = arith.constant dense<0.000000e+00> : vector<8x8xf32>
    %10 = tpu.matmul %9, %8, %cst_8 {dimension_numbers = #tpu.dot_dimension_numbers<[1], [0], [0], [1], [0, 0, 1, 1], [], []>} : vector<8x32xf32>, vector<32x8xf32>, vector<8x8xf32> -> vector<8x8xf32>
    %c0_9 = arith.constant 0 : index
    %c0_10 = arith.constant 0 : index
    %11 = vector.load %arg5[%c0_9, %c0_10] : memref<8x1xf32, #tpu.memory_space<vmem>>, vector<8x1xf32>
    %12 = vector.broadcast %11 : vector<8x1xf32> to vector<8x8xf32>
    %13 = arith.addf %10, %12 : vector<8x8xf32>
    %cst_11 = arith.constant 0.000000e+00 : f32
    %14 = vector.broadcast %cst_11 : f32 to vector<8x8xf32>
    %15 = arith.maximumf %13, %14 : vector<8x8xf32>
    %c0_12 = arith.constant 0 : index
    %c0_13 = arith.constant 0 : index
    %16 = vector.load %arg6[%c0_12, %c0_13] : memref<8x1xf32, #tpu.memory_space<vmem>>, vector<8x1xf32>
    %17 = vector.broadcast %16 : vector<8x1xf32> to vector<8x8xf32>
    %18 = arith.mulf %15, %17 : vector<8x8xf32>
    %cst_14 = arith.constant dense<0.000000e+00> : vector<8xf32>
    %19 = vector.multi_reduction <add>, %18, %cst_14 [0] : vector<8x8xf32> to vector<8xf32>
    %20 = vector.shape_cast %19 : vector<8xf32> to vector<1x8xf32>
    %c0_15 = arith.constant 0 : index
    %c0_16 = arith.constant 0 : index
    %21 = vector.load %arg7[%c0_15, %c0_16] : memref<1x1xf32, #tpu.memory_space<vmem>>, vector<1x1xf32>
    %22 = vector.broadcast %21 : vector<1x1xf32> to vector<1x8xf32>
    %23 = arith.addf %20, %22 : vector<1x8xf32>
    %cst_17 = arith.constant 0.000000e+00 : f32
    %24 = vector.broadcast %cst_17 : f32 to vector<1x8xf32>
    %25 = arith.subf %24, %23 : vector<1x8xf32>
    %26 = math.exp %25 : vector<1x8xf32>
    %cst_18 = arith.constant 1.000000e+00 : f32
    %27 = vector.broadcast %cst_18 : f32 to vector<1x8xf32>
    %28 = arith.addf %27, %26 : vector<1x8xf32>
    %cst_19 = arith.constant 1.000000e+00 : f32
    %29 = vector.broadcast %cst_19 : f32 to vector<1x8xf32>
    %30 = arith.divf %29, %28 : vector<1x8xf32>
    %c0_20 = arith.constant 0 : index
    %c0_21 = arith.constant 0 : index
    %31 = vector.load %arg8[%c0_20, %c0_21] : memref<1x8xf32, #tpu.memory_space<vmem>>, vector<1x8xf32>
    tpu.vector_store %arg8[%c0_20, %c0_21], %30 {strides = array<i32>} : memref<1x8xf32, #tpu.memory_space<vmem>>, vector<1x8xf32>,
    return
  }
  func.func @transform_0(%arg0: i32) -> (i32, i32) {
    %c0_i32 = arith.constant 0 : i32
    %c0_i32_0 = arith.constant 0 : i32
    return %arg0, %c0_i32 : i32, i32
  }
  func.func @transform_1(%arg0: i32) -> (i32, i32) {
    %c0_i32 = arith.constant 0 : i32
    %c0_i32_0 = arith.constant 0 : i32
    %c0_i32_1 = arith.constant 0 : i32
    return %c0_i32, %c0_i32_0 : i32, i32
  }
  func.func @transform_2(%arg0: i32) -> (i32, i32) {
    %c0_i32 = arith.constant 0 : i32
    %c0_i32_0 = arith.constant 0 : i32
    %c0_i32_1 = arith.constant 0 : i32
    return %c0_i32, %c0_i32_0 : i32, i32
  }
  func.func @transform_3(%arg0: i32) -> (i32, i32) {
    %c0_i32 = arith.constant 0 : i32
    %c0_i32_0 = arith.constant 0 : i32
    %c0_i32_1 = arith.constant 0 : i32
    return %c0_i32, %c0_i32_0 : i32, i32
  }
  func.func @transform_4(%arg0: i32) -> (i32, i32) {
    %c0_i32 = arith.constant 0 : i32
    %c0_i32_0 = arith.constant 0 : i32
    %c0_i32_1 = arith.constant 0 : i32
    return %c0_i32, %c0_i32_0 : i32, i32
  }
  func.func @transform_5(%arg0: i32) -> (i32, i32) {
    %c0_i32 = arith.constant 0 : i32
    %c0_i32_0 = arith.constant 0 : i32
    %c0_i32_1 = arith.constant 0 : i32
    return %c0_i32, %c0_i32_0 : i32, i32
  }
  func.func @transform_6(%arg0: i32) -> (i32, i32) {
    %c0_i32 = arith.constant 0 : i32
    %c0_i32_0 = arith.constant 0 : i32
    %c0_i32_1 = arith.constant 0 : i32
    return %c0_i32, %c0_i32_0 : i32, i32
  }
  func.func @transform_7(%arg0: i32) -> (i32, i32) {
    %c0_i32 = arith.constant 0 : i32
    %c0_i32_0 = arith.constant 0 : i32
    return %c0_i32, %arg0 : i32, i32
  }
}

</mosaic_0001>

<llo_original>
// kernel: tpu_custom_call.1
$region0: #{tpu_custom_call.1}
  #allocation0 [shape = 'u32[]', space=smem, size = 0x4, offset = 0x4, fixed_abs, tag = 'smem constant byte address 0x4 - core index']
  #allocation1 [shape = 'u32[144,128]{1,0:T(1,128)}', space=vmem, size = 0x12000, scoped, tag = 'internal scratch']
  #allocation2 [shape = 'f32[1,1]{1,0:T(1,128)S(1)}', space=vmem, size = 0x200, scoped, tag = 'scoped memory for tpu_custom_call.1']
  %s0 = inlined_call_operand.vmem [shape: f32[8,2680], index: 0, kind: input, shape index: {}]
  %s1 = inlined_call_operand.vmem [shape: f32[2680,32], index: 1, kind: input, shape index: {}]
  %s2 = inlined_call_operand.vmem [shape: f32[1,32], index: 2, kind: input, shape index: {}]
  %s3 = inlined_call_operand.vmem [shape: f32[8,32], index: 3, kind: input, shape index: {}]
  %s4 = inlined_call_operand.vmem [shape: f32[8,1], index: 4, kind: input, shape index: {}]
  %s5 = inlined_call_operand.vmem [shape: f32[8,1], index: 5, kind: input, shape index: {}]
  %s6 = inlined_call_operand.<no memory space> [shape: f32[1,1], index: 6, kind: input, shape index: {}]
  %s7 = inlined_call_operand.hbm [shape: f32[1,8], index: 7, kind: output, shape index: {}]
  %s8 = sld [smem:[#allocation0]]
  $region38: #{tpu_custom_call.1} parent=0
    _
  %s10 = ssub.s32 1, %s8
  %s11 = scalar_select 0, %s10, %s8
  %v12 = vstv %s6
  %13 = vst [vmem:[#allocation2] sm:$0x1] %v12
  $region1: #{tpu_custom_call.1} parent=0
    #allocation3 [shape = 'u8[512]{0}', space=vmem, size = 0x400, scoped, tag = 'output window, operand 0, single buffered']
    #allocation4 [shape = 's32[1]{0}', space=sflag, size = 0x4, scoped, tag = 'scoped memory for tpu_custom_call.1']
    %14 = vsyncpa [#allocation4], 0
    // Predicated region
    $region2: #{tpu_custom_call.1} parent=1 // pred_check
      _
    $region3: #{tpu_custom_call.1} parent=1 // pred_check_branch
      %16 = sbr.rel (0) target = $region5
    $region4: #{tpu_custom_call.1} parent=1 // pred_region
      _
    $region5: #{tpu_custom_call.1} parent=1 // pred_fallthru
      _
    // Predicated region
    $region6: #{tpu_custom_call.1} parent=1 // pred_check
      _
    $region7: #{tpu_custom_call.1} parent=1 // pred_check_branch
      %18 = sbr.rel (0) target = $region9
    $region8: #{tpu_custom_call.1} parent=1 // pred_region
      _
    $region9: #{tpu_custom_call.1} parent=1 // pred_fallthru
      _
    // Predicated region
    $region10: #{tpu_custom_call.1} parent=1 // pred_check
      _
    $region11: #{tpu_custom_call.1} parent=1 // pred_check_branch
      %20 = sbr.rel (0) target = $region13
    $region12: #{tpu_custom_call.1} parent=1 // pred_region
      _
    $region13: #{tpu_custom_call.1} parent=1 // pred_fallthru
      _
    // Predicated region
    $region14: #{tpu_custom_call.1} parent=1 // pred_check
      _
    $region15: #{tpu_custom_call.1} parent=1 // pred_check_branch
      %22 = sbr.rel (0) target = $region17
    $region16: #{tpu_custom_call.1} parent=1 // pred_region
      _
    $region17: #{tpu_custom_call.1} parent=1 // pred_fallthru
      _
    // Predicated region
    $region18: #{tpu_custom_call.1} parent=1 // pred_check
      _
    $region19: #{tpu_custom_call.1} parent=1 // pred_check_branch
      %24 = sbr.rel (0) target = $region21
    $region20: #{tpu_custom_call.1} parent=1 // pred_region
      _
    $region21: #{tpu_custom_call.1} parent=1 // pred_fallthru
      _
    // Predicated region
    $region22: #{tpu_custom_call.1} parent=1 // pred_check
      _
    $region23: #{tpu_custom_call.1} parent=1 // pred_check_branch
      %26 = sbr.rel (0) target = $region25
    $region24: #{tpu_custom_call.1} parent=1 // pred_region
      _
    $region25: #{tpu_custom_call.1} parent=1 // pred_fallthru
      _
    // Predicated region
    $region26: #{tpu_custom_call.1} parent=1 // pred_check
      _
    $region27: #{tpu_custom_call.1} parent=1 // pred_check_branch
      %28 = sbr.rel (0) target = $region29
    $region28: #{tpu_custom_call.1} parent=1 // pred_region
      _
    $region29: #{tpu_custom_call.1} parent=1 // pred_fallthru
      _
    %v29 = vld [vmem:[%s0] sm:$0xff]
    %v30 = vld [vmem:[%s0 + $0x8] sm:$0xff]
    %v31 = vld [vmem:[%s0 + $0x10] sm:$0xff]
    %v32 = vld [vmem:[%s0 + $0x18] sm:$0xff]
    %v33 = vld [vmem:[%s0 + $0x20] sm:$0xff]
    %v34 = vld [vmem:[%s0 + $0x28] sm:$0xff]
    %v35 = vld [vmem:[%s0 + $0x30] sm:$0xff]
    %v36 = vld [vmem:[%s0 + $0x38] sm:$0xff]
    %v37 = vld [vmem:[%s0 + $0x40] sm:$0xff]
    %v38 = vld [vmem:[%s0 + $0x48] sm:$0xff]
    %v39 = vld [vmem:[%s0 + $0x50] sm:$0xff]
    %v40 = vld [vmem:[%s0 + $0x58] sm:$0xff]
    %v41 = vld [vmem:[%s0 + $0x60] sm:$0xff]
    %v42 = vld [vmem:[%s0 + $0x68] sm:$0xff]
    %v43 = vld [vmem:[%s0 + $0x70] sm:$0xff]
    %v44 = vld [vmem:[%s0 + $0x78] sm:$0xff]
    %v45 = vld [vmem:[%s0 + $0x80] sm:$0xff]
    %v46 = vld [vmem:[%s0 + $0x88] sm:$0xff]
    %v47 = vld [vmem:[%s0 + $0x90] sm:$0xff]
    %v48 = vld [vmem:[%s0 + $0x98] sm:$0xff]
    %v49 = vld [vmem:[%s0 + $0xa0] sm:$0xff]
    %v50 = vld [vmem:[%s1] sm:$0xff]
    %v51 = vld [vmem:[%s1 + $0x8] sm:$0xff]
    %v52 = vld [vmem:[%s1 + $0x10] sm:$0xff]
    %v53 = vld [vmem:[%s1 + $0x18] sm:$0xff]
    %v54 = vld [vmem:[%s1 + $0x20] sm:$0xff]
    %v55 = vld [vmem:[%s1 + $0x28] sm:$0xff]
    %v56 = vld [vmem:[%s1 + $0x30] sm:$0xff]
    %v57 = vld [vmem:[%s1 + $0x38] sm:$0xff]
    %v58 = vld [vmem:[%s1 + $0x40] sm:$0xff]
    %v59 = vld [vmem:[%s1 + $0x48] sm:$0xff]
    %v60 = vld [vmem:[%s1 + $0x50] sm:$0xff]
    %v61 = vld [vmem:[%s1 + $0x58] sm:$0xff]
    %v62 = vld [vmem:[%s1 + $0x60] sm:$0xff]
    %v63 = vld [vmem:[%s1 + $0x68] sm:$0xff]
    %v64 = vld [vmem:[%s1 + $0x70] sm:$0xff]
    %v65 = vld [vmem:[%s1 + $0x78] sm:$0xff]
    %v66 = vld [vmem:[%s1 + $0x80] sm:$0xff]
    %v67 = vld [vmem:[%s1 + $0x88] sm:$0xff]
    %v68 = vld [vmem:[%s1 + $0x90] sm:$0xff]
    %v69 = vld [vmem:[%s1 + $0x98] sm:$0xff]
    %v70 = vld [vmem:[%s1 + $0xa0] sm:$0xff]
    %v71 = vld [vmem:[%s1 + $0xa8] sm:$0xff]
    %v72 = vld [vmem:[%s1 + $0xb0] sm:$0xff]
    %v73 = vld [vmem:[%s1 + $0xb8] sm:$0xff]
    %v74 = vld [vmem:[%s1 + $0xc0] sm:$0xff]
    %v75 = vld [vmem:[%s1 + $0xc8] sm:$0xff]
    %v76 = vld [vmem:[%s1 + $0xd0] sm:$0xff]
    %v77 = vld [vmem:[%s1 + $0xd8] sm:$0xff]
    %v78 = vld [vmem:[%s1 + $0xe0] sm:$0xff]
    %v79 = vld [vmem:[%s1 + $0xe8] sm:$0xff]
    %v80 = vld [vmem:[%s1 + $0xf0] sm:$0xff]
    %v81 = vld [vmem:[%s1 + $0xf8] sm:$0xff]
    %v82 = vld [vmem:[%s1 + $0x100] sm:$0xff]
    %v83 = vld [vmem:[%s1 + $0x108] sm:$0xff]
    %v84 = vld [vmem:[%s1 + $0x110] sm:$0xff]
    %v85 = vld [vmem:[%s1 + $0x118] sm:$0xff]
    %v86 = vld [vmem:[%s1 + $0x120] sm:$0xff]
    %v87 = vld [vmem:[%s1 + $0x128] sm:$0xff]
    %v88 = vld [vmem:[%s1 + $0x130] sm:$0xff]
    %v89 = vld [vmem:[%s1 + $0x138] sm:$0xff]
    %v90 = vld [vmem:[%s1 + $0x140] sm:$0xff]
    %v91 = vld [vmem:[%s1 + $0x148] sm:$0xff]
    %v92 = vld [vmem:[%s1 + $0x150] sm:$0xff]
    %v93 = vld [vmem:[%s1 + $0x158] sm:$0xff]
    %v94 = vld [vmem:[%s1 + $0x160] sm:$0xff]
    %v95 = vld [vmem:[%s1 + $0x168] sm:$0xff]
    %v96 = vld [vmem:[%s1 + $0x170] sm:$0xff]
    %v97 = vld [vmem:[%s1 + $0x178] sm:$0xff]
    %v98 = vld [vmem:[%s1 + $0x180] sm:$0xff]
    %v99 = vld [vmem:[%s1 + $0x188] sm:$0xff]
    %v100 = vld [vmem:[%s1 + $0x190] sm:$0xff]
    %v101 = vld [vmem:[%s1 + $0x198] sm:$0xff]
    %v102 = vld [vmem:[%s1 + $0x1a0] sm:$0xff]
    %v103 = vld [vmem:[%s1 + $0x1a8] sm:$0xff]
    %v104 = vld [vmem:[%s1 + $0x1b0] sm:$0xff]
    %v105 = vld [vmem:[%s1 + $0x1b8] sm:$0xff]
    %v106 = vld [vmem:[%s1 + $0x1c0] sm:$0xff]
    %v107 = vld [vmem:[%s1 + $0x1c8] sm:$0xff]
    %v108 = vld [vmem:[%s1 + $0x1d0] sm:$0xff]
    %v109 = vld [vmem:[%s1 + $0x1d8] sm:$0xff]
    %v110 = vld [vmem:[%s1 + $0x1e0] sm:$0xff]
    %v111 = vld [vmem:[%s1 + $0x1e8] sm:$0xff]
    %v112 = vld [vmem:[%s1 + $0x1f0] sm:$0xff]
    %v113 = vld [vmem:[%s1 + $0x1f8] sm:$0xff]
    %v114 = vld [vmem:[%s1 + $0x200] sm:$0xff]
    %v115 = vld [vmem:[%s1 + $0x208] sm:$0xff]
    %v116 = vld [vmem:[%s1 + $0x210] sm:$0xff]
    %v117 = vld [vmem:[%s1 + $0x218] sm:$0xff]
    %v118 = vld [vmem:[%s1 + $0x220] sm:$0xff]
    %v119 = vld [vmem:[%s1 + $0x228] sm:$0xff]
    %v120 = vld [vmem:[%s1 + $0x230] sm:$0xff]
    %v121 = vld [vmem:[%s1 + $0x238] sm:$0xff]
    %v122 = vld [vmem:[%s1 + $0x240] sm:$0xff]
    %v123 = vld [vmem:[%s1 + $0x248] sm:$0xff]
    %v124 = vld [vmem:[%s1 + $0x250] sm:$0xff]
    %v125 = vld [vmem:[%s1 + $0x258] sm:$0xff]
    %v126 = vld [vmem:[%s1 + $0x260] sm:$0xff]
    %v127 = vld [vmem:[%s1 + $0x268] sm:$0xff]
    %v128 = vld [vmem:[%s1 + $0x270] sm:$0xff]
    %v129 = vld [vmem:[%s1 + $0x278] sm:$0xff]
    %v130 = vld [vmem:[%s1 + $0x280] sm:$0xff]
    %v131 = vld [vmem:[%s1 + $0x288] sm:$0xff]
    %v132 = vld [vmem:[%s1 + $0x290] sm:$0xff]
    %v133 = vld [vmem:[%s1 + $0x298] sm:$0xff]
    %v134 = vld [vmem:[%s1 + $0x2a0] sm:$0xff]
    %v135 = vld [vmem:[%s1 + $0x2a8] sm:$0xff]
    %v136 = vld [vmem:[%s1 + $0x2b0] sm:$0xff]
    %v137 = vld [vmem:[%s1 + $0x2b8] sm:$0xff]
    %v138 = vld [vmem:[%s1 + $0x2c0] sm:$0xff]
    %v139 = vld [vmem:[%s1 + $0x2c8] sm:$0xff]
    %v140 = vld [vmem:[%s1 + $0x2d0] sm:$0xff]
    %v141 = vld [vmem:[%s1 + $0x2d8] sm:$0xff]
    %v142 = vld [vmem:[%s1 + $0x2e0] sm:$0xff]
    %v143 = vld [vmem:[%s1 + $0x2e8] sm:$0xff]
    %v144 = vld [vmem:[%s1 + $0x2f0] sm:$0xff]
    %v145 = vld [vmem:[%s1 + $0x2f8] sm:$0xff]
    %v146 = vld [vmem:[%s1 + $0x300] sm:$0xff]
    %v147 = vld [vmem:[%s1 + $0x308] sm:$0xff]
    %v148 = vld [vmem:[%s1 + $0x310] sm:$0xff]
    %v149 = vld [vmem:[%s1 + $0x318] sm:$0xff]
    %v150 = vld [vmem:[%s1 + $0x320] sm:$0xff]
    %v151 = vld [vmem:[%s1 + $0x328] sm:$0xff]
    %v152 = vld [vmem:[%s1 + $0x330] sm:$0xff]
    %v153 = vld [vmem:[%s1 + $0x338] sm:$0xff]
    %v154 = vld [vmem:[%s1 + $0x340] sm:$0xff]
    %v155 = vld [vmem:[%s1 + $0x348] sm:$0xff]
    %v156 = vld [vmem:[%s1 + $0x350] sm:$0xff]
    %v157 = vld [vmem:[%s1 + $0x358] sm:$0xff]
    %v158 = vld [vmem:[%s1 + $0x360] sm:$0xff]
    %v159 = vld [vmem:[%s1 + $0x368] sm:$0xff]
    %v160 = vld [vmem:[%s1 + $0x370] sm:$0xff]
    %v161 = vld [vmem:[%s1 + $0x378] sm:$0xff]
    %v162 = vld [vmem:[%s1 + $0x380] sm:$0xff]
    %v163 = vld [vmem:[%s1 + $0x388] sm:$0xff]
    %v164 = vld [vmem:[%s1 + $0x390] sm:$0xff]
    %v165 = vld [vmem:[%s1 + $0x398] sm:$0xff]
    %v166 = vld [vmem:[%s1 + $0x3a0] sm:$0xff]
    %v167 = vld [vmem:[%s1 + $0x3a8] sm:$0xff]
    %v168 = vld [vmem:[%s1 + $0x3b0] sm:$0xff]
    %v169 = vld [vmem:[%s1 + $0x3b8] sm:$0xff]
    %v170 = vld [vmem:[%s1 + $0x3c0] sm:$0xff]
    %v171 = vld [vmem:[%s1 + $0x3c8] sm:$0xff]
    %v172 = vld [vmem:[%s1 + $0x3d0] sm:$0xff]
    %v173 = vld [vmem:[%s1 + $0x3d8] sm:$0xff]
    %v174 = vld [vmem:[%s1 + $0x3e0] sm:$0xff]
    %v175 = vld [vmem:[%s1 + $0x3e8] sm:$0xff]
    %v176 = vld [vmem:[%s1 + $0x3f0] sm:$0xff]
    %v177 = vld [vmem:[%s1 + $0x3f8] sm:$0xff]
    %v178 = vld [vmem:[%s1 + $0x400] sm:$0xff]
    %v179 = vld [vmem:[%s1 + $0x408] sm:$0xff]
    %v180 = vld [vmem:[%s1 + $0x410] sm:$0xff]
    %v181 = vld [vmem:[%s1 + $0x418] sm:$0xff]
    %v182 = vld [vmem:[%s1 + $0x420] sm:$0xff]
    %v183 = vld [vmem:[%s1 + $0x428] sm:$0xff]
    %v184 = vld [vmem:[%s1 + $0x430] sm:$0xff]
    %v185 = vld [vmem:[%s1 + $0x438] sm:$0xff]
    %v186 = vld [vmem:[%s1 + $0x440] sm:$0xff]
    %v187 = vld [vmem:[%s1 + $0x448] sm:$0xff]
    %v188 = vld [vmem:[%s1 + $0x450] sm:$0xff]
    %v189 = vld [vmem:[%s1 + $0x458] sm:$0xff]
    %v190 = vld [vmem:[%s1 + $0x460] sm:$0xff]
    %v191 = vld [vmem:[%s1 + $0x468] sm:$0xff]
    %v192 = vld [vmem:[%s1 + $0x470] sm:$0xff]
    %v193 = vld [vmem:[%s1 + $0x478] sm:$0xff]
    %v194 = vld [vmem:[%s1 + $0x480] sm:$0xff]
    %v195 = vld [vmem:[%s1 + $0x488] sm:$0xff]
    %v196 = vld [vmem:[%s1 + $0x490] sm:$0xff]
    %v197 = vld [vmem:[%s1 + $0x498] sm:$0xff]
    %v198 = vld [vmem:[%s1 + $0x4a0] sm:$0xff]
    %v199 = vld [vmem:[%s1 + $0x4a8] sm:$0xff]
    %v200 = vld [vmem:[%s1 + $0x4b0] sm:$0xff]
    %v201 = vld [vmem:[%s1 + $0x4b8] sm:$0xff]
    %v202 = vld [vmem:[%s1 + $0x4c0] sm:$0xff]
    %v203 = vld [vmem:[%s1 + $0x4c8] sm:$0xff]
    %v204 = vld [vmem:[%s1 + $0x4d0] sm:$0xff]
    %v205 = vld [vmem:[%s1 + $0x4d8] sm:$0xff]
    %v206 = vld [vmem:[%s1 + $0x4e0] sm:$0xff]
    %v207 = vld [vmem:[%s1 + $0x4e8] sm:$0xff]
    %v208 = vld [vmem:[%s1 + $0x4f0] sm:$0xff]
    %v209 = vld [vmem:[%s1 + $0x4f8] sm:$0xff]
    %v210 = vld [vmem:[%s1 + $0x500] sm:$0xff]
    %v211 = vld [vmem:[%s1 + $0x508] sm:$0xff]
    %v212 = vld [vmem:[%s1 + $0x510] sm:$0xff]
    %v213 = vld [vmem:[%s1 + $0x518] sm:$0xff]
    %v214 = vld [vmem:[%s1 + $0x520] sm:$0xff]
    %v215 = vld [vmem:[%s1 + $0x528] sm:$0xff]
    %v216 = vld [vmem:[%s1 + $0x530] sm:$0xff]
    %v217 = vld [vmem:[%s1 + $0x538] sm:$0xff]
    %v218 = vld [vmem:[%s1 + $0x540] sm:$0xff]
    %v219 = vld [vmem:[%s1 + $0x548] sm:$0xff]
    %v220 = vld [vmem:[%s1 + $0x550] sm:$0xff]
    %v221 = vld [vmem:[%s1 + $0x558] sm:$0xff]
    %v222 = vld [vmem:[%s1 + $0x560] sm:$0xff]
    %v223 = vld [vmem:[%s1 + $0x568] sm:$0xff]
    %v224 = vld [vmem:[%s1 + $0x570] sm:$0xff]
    %v225 = vld [vmem:[%s1 + $0x578] sm:$0xff]
    %v226 = vld [vmem:[%s1 + $0x580] sm:$0xff]
    %v227 = vld [vmem:[%s1 + $0x588] sm:$0xff]
    %v228 = vld [vmem:[%s1 + $0x590] sm:$0xff]
    %v229 = vld [vmem:[%s1 + $0x598] sm:$0xff]
    %v230 = vld [vmem:[%s1 + $0x5a0] sm:$0xff]
    %v231 = vld [vmem:[%s1 + $0x5a8] sm:$0xff]
    %v232 = vld [vmem:[%s1 + $0x5b0] sm:$0xff]
    %v233 = vld [vmem:[%s1 + $0x5b8] sm:$0xff]
    %v234 = vld [vmem:[%s1 + $0x5c0] sm:$0xff]
    %v235 = vld [vmem:[%s1 + $0x5c8] sm:$0xff]
    %v236 = vld [vmem:[%s1 + $0x5d0] sm:$0xff]
    %v237 = vld [vmem:[%s1 + $0x5d8] sm:$0xff]
    %v238 = vld [vmem:[%s1 + $0x5e0] sm:$0xff]
    %v239 = vld [vmem:[%s1 + $0x5e8] sm:$0xff]
    %v240 = vld [vmem:[%s1 + $0x5f0] sm:$0xff]
    %v241 = vld [vmem:[%s1 + $0x5f8] sm:$0xff]
    %v242 = vld [vmem:[%s1 + $0x600] sm:$0xff]
    %v243 = vld [vmem:[%s1 + $0x608] sm:$0xff]
    %v244 = vld [vmem:[%s1 + $0x610] sm:$0xff]
    %v245 = vld [vmem:[%s1 + $0x618] sm:$0xff]
    %v246 = vld [vmem:[%s1 + $0x620] sm:$0xff]
    %v247 = vld [vmem:[%s1 + $0x628] sm:$0xff]
    %v248 = vld [vmem:[%s1 + $0x630] sm:$0xff]
    %v249 = vld [vmem:[%s1 + $0x638] sm:$0xff]
    %v250 = vld [vmem:[%s1 + $0x640] sm:$0xff]
    %v251 = vld [vmem:[%s1 + $0x648] sm:$0xff]
    %v252 = vld [vmem:[%s1 + $0x650] sm:$0xff]
    %v253 = vld [vmem:[%s1 + $0x658] sm:$0xff]
    %v254 = vld [vmem:[%s1 + $0x660] sm:$0xff]
    %v255 = vld [vmem:[%s1 + $0x668] sm:$0xff]
    %v256 = vld [vmem:[%s1 + $0x670] sm:$0xff]
    %v257 = vld [vmem:[%s1 + $0x678] sm:$0xff]
    %v258 = vld [vmem:[%s1 + $0x680] sm:$0xff]
    %v259 = vld [vmem:[%s1 + $0x688] sm:$0xff]
    %v260 = vld [vmem:[%s1 + $0x690] sm:$0xff]
    %v261 = vld [vmem:[%s1 + $0x698] sm:$0xff]
    %v262 = vld [vmem:[%s1 + $0x6a0] sm:$0xff]
    %v263 = vld [vmem:[%s1 + $0x6a8] sm:$0xff]
    %v264 = vld [vmem:[%s1 + $0x6b0] sm:$0xff]
    %v265 = vld [vmem:[%s1 + $0x6b8] sm:$0xff]
    %v266 = vld [vmem:[%s1 + $0x6c0] sm:$0xff]
    %v267 = vld [vmem:[%s1 + $0x6c8] sm:$0xff]
    %v268 = vld [vmem:[%s1 + $0x6d0] sm:$0xff]
    %v269 = vld [vmem:[%s1 + $0x6d8] sm:$0xff]
    %v270 = vld [vmem:[%s1 + $0x6e0] sm:$0xff]
    %v271 = vld [vmem:[%s1 + $0x6e8] sm:$0xff]
    %v272 = vld [vmem:[%s1 + $0x6f0] sm:$0xff]
    %v273 = vld [vmem:[%s1 + $0x6f8] sm:$0xff]
    %v274 = vld [vmem:[%s1 + $0x700] sm:$0xff]
    %v275 = vld [vmem:[%s1 + $0x708] sm:$0xff]
    %v276 = vld [vmem:[%s1 + $0x710] sm:$0xff]
    %v277 = vld [vmem:[%s1 + $0x718] sm:$0xff]
    %v278 = vld [vmem:[%s1 + $0x720] sm:$0xff]
    %v279 = vld [vmem:[%s1 + $0x728] sm:$0xff]
    %v280 = vld [vmem:[%s1 + $0x730] sm:$0xff]
    %v281 = vld [vmem:[%s1 + $0x738] sm:$0xff]
    %v282 = vld [vmem:[%s1 + $0x740] sm:$0xff]
    %v283 = vld [vmem:[%s1 + $0x748] sm:$0xff]
    %v284 = vld [vmem:[%s1 + $0x750] sm:$0xff]
    %v285 = vld [vmem:[%s1 + $0x758] sm:$0xff]
    %v286 = vld [vmem:[%s1 + $0x760] sm:$0xff]
    %v287 = vld [vmem:[%s1 + $0x768] sm:$0xff]
    %v288 = vld [vmem:[%s1 + $0x770] sm:$0xff]
    %v289 = vld [vmem:[%s1 + $0x778] sm:$0xff]
    %v290 = vld [vmem:[%s1 + $0x780] sm:$0xff]
    %v291 = vld [vmem:[%s1 + $0x788] sm:$0xff]
    %v292 = vld [vmem:[%s1 + $0x790] sm:$0xff]
    %v293 = vld [vmem:[%s1 + $0x798] sm:$0xff]
    %v294 = vld [vmem:[%s1 + $0x7a0] sm:$0xff]
    %v295 = vld [vmem:[%s1 + $0x7a8] sm:$0xff]
    %v296 = vld [vmem:[%s1 + $0x7b0] sm:$0xff]
    %v297 = vld [vmem:[%s1 + $0x7b8] sm:$0xff]
    %v298 = vld [vmem:[%s1 + $0x7c0] sm:$0xff]
    %v299 = vld [vmem:[%s1 + $0x7c8] sm:$0xff]
    %v300 = vld [vmem:[%s1 + $0x7d0] sm:$0xff]
    %v301 = vld [vmem:[%s1 + $0x7d8] sm:$0xff]
    %v302 = vld [vmem:[%s1 + $0x7e0] sm:$0xff]
    %v303 = vld [vmem:[%s1 + $0x7e8] sm:$0xff]
    %v304 = vld [vmem:[%s1 + $0x7f0] sm:$0xff]
    %v305 = vld [vmem:[%s1 + $0x7f8] sm:$0xff]
    %v306 = vld [vmem:[%s1 + $0x800] sm:$0xff]
    %v307 = vld [vmem:[%s1 + $0x808] sm:$0xff]
    %v308 = vld [vmem:[%s1 + $0x810] sm:$0xff]
    %v309 = vld [vmem:[%s1 + $0x818] sm:$0xff]
    %v310 = vld [vmem:[%s1 + $0x820] sm:$0xff]
    %v311 = vld [vmem:[%s1 + $0x828] sm:$0xff]
    %v312 = vld [vmem:[%s1 + $0x830] sm:$0xff]
    %v313 = vld [vmem:[%s1 + $0x838] sm:$0xff]
    %v314 = vld [vmem:[%s1 + $0x840] sm:$0xff]
    %v315 = vld [vmem:[%s1 + $0x848] sm:$0xff]
    %v316 = vld [vmem:[%s1 + $0x850] sm:$0xff]
    %v317 = vld [vmem:[%s1 + $0x858] sm:$0xff]
    %v318 = vld [vmem:[%s1 + $0x860] sm:$0xff]
    %v319 = vld [vmem:[%s1 + $0x868] sm:$0xff]
    %v320 = vld [vmem:[%s1 + $0x870] sm:$0xff]
    %v321 = vld [vmem:[%s1 + $0x878] sm:$0xff]
    %v322 = vld [vmem:[%s1 + $0x880] sm:$0xff]
    %v323 = vld [vmem:[%s1 + $0x888] sm:$0xff]
    %v324 = vld [vmem:[%s1 + $0x890] sm:$0xff]
    %v325 = vld [vmem:[%s1 + $0x898] sm:$0xff]
    %v326 = vld [vmem:[%s1 + $0x8a0] sm:$0xff]
    %v327 = vld [vmem:[%s1 + $0x8a8] sm:$0xff]
    %v328 = vld [vmem:[%s1 + $0x8b0] sm:$0xff]
    %v329 = vld [vmem:[%s1 + $0x8b8] sm:$0xff]
    %v330 = vld [vmem:[%s1 + $0x8c0] sm:$0xff]
    %v331 = vld [vmem:[%s1 + $0x8c8] sm:$0xff]
    %v332 = vld [vmem:[%s1 + $0x8d0] sm:$0xff]
    %v333 = vld [vmem:[%s1 + $0x8d8] sm:$0xff]
    %v334 = vld [vmem:[%s1 + $0x8e0] sm:$0xff]
    %v335 = vld [vmem:[%s1 + $0x8e8] sm:$0xff]
    %v336 = vld [vmem:[%s1 + $0x8f0] sm:$0xff]
    %v337 = vld [vmem:[%s1 + $0x8f8] sm:$0xff]
    %v338 = vld [vmem:[%s1 + $0x900] sm:$0xff]
    %v339 = vld [vmem:[%s1 + $0x908] sm:$0xff]
    %v340 = vld [vmem:[%s1 + $0x910] sm:$0xff]
    %v341 = vld [vmem:[%s1 + $0x918] sm:$0xff]
    %v342 = vld [vmem:[%s1 + $0x920] sm:$0xff]
    %v343 = vld [vmem:[%s1 + $0x928] sm:$0xff]
    %v344 = vld [vmem:[%s1 + $0x930] sm:$0xff]
    %v345 = vld [vmem:[%s1 + $0x938] sm:$0xff]
    %v346 = vld [vmem:[%s1 + $0x940] sm:$0xff]
    %v347 = vld [vmem:[%s1 + $0x948] sm:$0xff]
    %v348 = vld [vmem:[%s1 + $0x950] sm:$0xff]
    %v349 = vld [vmem:[%s1 + $0x958] sm:$0xff]
    %v350 = vld [vmem:[%s1 + $0x960] sm:$0xff]
    %v351 = vld [vmem:[%s1 + $0x968] sm:$0xff]
    %v352 = vld [vmem:[%s1 + $0x970] sm:$0xff]
    %v353 = vld [vmem:[%s1 + $0x978] sm:$0xff]
    %v354 = vld [vmem:[%s1 + $0x980] sm:$0xff]
    %v355 = vld [vmem:[%s1 + $0x988] sm:$0xff]
    %v356 = vld [vmem:[%s1 + $0x990] sm:$0xff]
    %v357 = vld [vmem:[%s1 + $0x998] sm:$0xff]
    %v358 = vld [vmem:[%s1 + $0x9a0] sm:$0xff]
    %v359 = vld [vmem:[%s1 + $0x9a8] sm:$0xff]
    %v360 = vld [vmem:[%s1 + $0x9b0] sm:$0xff]
    %v361 = vld [vmem:[%s1 + $0x9b8] sm:$0xff]
    %v362 = vld [vmem:[%s1 + $0x9c0] sm:$0xff]
    %v363 = vld [vmem:[%s1 + $0x9c8] sm:$0xff]
    %v364 = vld [vmem:[%s1 + $0x9d0] sm:$0xff]
    %v365 = vld [vmem:[%s1 + $0x9d8] sm:$0xff]
    %v366 = vld [vmem:[%s1 + $0x9e0] sm:$0xff]
    %v367 = vld [vmem:[%s1 + $0x9e8] sm:$0xff]
    %v368 = vld [vmem:[%s1 + $0x9f0] sm:$0xff]
    %v369 = vld [vmem:[%s1 + $0x9f8] sm:$0xff]
    %v370 = vld [vmem:[%s1 + $0xa00] sm:$0xff]
    %v371 = vld [vmem:[%s1 + $0xa08] sm:$0xff]
    %v372 = vld [vmem:[%s1 + $0xa10] sm:$0xff]
    %v373 = vld [vmem:[%s1 + $0xa18] sm:$0xff]
    %v374 = vld [vmem:[%s1 + $0xa20] sm:$0xff]
    %v375 = vld [vmem:[%s1 + $0xa28] sm:$0xff]
    %v376 = vld [vmem:[%s1 + $0xa30] sm:$0xff]
    %v377 = vld [vmem:[%s1 + $0xa38] sm:$0xff]
    %v378 = vld [vmem:[%s1 + $0xa40] sm:$0xff]
    %v379 = vld [vmem:[%s1 + $0xa48] sm:$0xff]
    %v380 = vld [vmem:[%s1 + $0xa50] sm:$0xff]
    %v381 = vld [vmem:[%s1 + $0xa58] sm:$0xff]
    %v382 = vld [vmem:[%s1 + $0xa60] sm:$0xff]
    %v383 = vld [vmem:[%s1 + $0xa68] sm:$0xff]
    %v384 = vld [vmem:[%s1 + $0xa70] sm:$0xff]
    %v385 = vld [vmem:[%s2] sm:$0x1]
    %v387 = vlaneseq
    %v388 = vshrl.u32 %v387, 7
    %v389 = vsub.s32 0, %v388
    %v390 = vrot.slane %v385, %v389
    %vm392 = vcmask 982016
    %v394 = vsel %vm392, %v49, 0
    %396 = vmatprep.subr.mxu0 0.0
    %397 = vmatpush1.msra.mxu0 %v50
    %398 = vmatprep.subr.mxu0 0.0
    %399 = vmatpush1.msra.mxu0 %v51
    %400 = vmatprep.subr.mxu0 0.0
    %401 = vmatpush1.msra.mxu0 %v52
    %402 = vmatprep.subr.mxu0 0.0
    %403 = vmatpush1.msra.mxu0 %v53
    %404 = vmatprep.subr.mxu0 0.0
    %405 = vmatpush1.msra.mxu0 %v54
    %406 = vmatprep.subr.mxu0 0.0
    %407 = vmatpush1.msra.mxu0 %v55
    %408 = vmatprep.subr.mxu0 0.0
    %409 = vmatpush1.msra.mxu0 %v56
    %410 = vmatprep.subr.mxu0 0.0
    %411 = vmatpush1.msra.mxu0 %v57
    %412 = vmatprep.subr.mxu0 0.0
    %413 = vmatpush1.msra.mxu0 %v58
    %414 = vmatprep.subr.mxu0 0.0
    %415 = vmatpush1.msra.mxu0 %v59
    %416 = vmatprep.subr.mxu0 0.0
    %417 = vmatpush1.msra.mxu0 %v60
    %418 = vmatprep.subr.mxu0 0.0
    %419 = vmatpush1.msra.mxu0 %v61
    %420 = vmatprep.subr.mxu0 0.0
    %421 = vmatpush1.msra.mxu0 %v62
    %422 = vmatprep.subr.mxu0 0.0
    %423 = vmatpush1.msra.mxu0 %v63
    %424 = vmatprep.subr.mxu0 0.0
    %425 = vmatpush1.msra.mxu0 %v64
    %426 = vmatprep.subr.mxu0 0.0
    %427 = vmatpush1.msra.mxu0 %v65
    %428 = vmatprep.subr.mxu0 0.0
    %429 = vmatpush1.msra.mxu0 %v66
    %430 = vmatprep.subr.mxu0 0.0
    %431 = vmatpush1.msra.mxu0 %v67
    %432 = vmatprep.subr.mxu0 0.0
    %433 = vmatpush1.msra.mxu0 %v68
    %434 = vmatprep.subr.mxu0 0.0
    %435 = vmatpush1.msra.mxu0 %v69
    %436 = vmatprep.subr.mxu0 0.0
    %437 = vmatpush1.msra.mxu0 %v70
    %438 = vmatprep.subr.mxu0 0.0
    %439 = vmatpush1.msra.mxu0 %v71
    %440 = vmatprep.subr.mxu0 0.0
    %441 = vmatpush1.msra.mxu0 %v72
    %442 = vmatprep.subr.mxu0 0.0
    %443 = vmatpush1.msra.mxu0 %v73
    %444 = vmatprep.subr.mxu0 0.0
    %445 = vmatpush1.msra.mxu0 %v74
    %446 = vmatprep.subr.mxu0 0.0
    %447 = vmatpush1.msra.mxu0 %v75
    %448 = vmatprep.subr.mxu0 0.0
    %449 = vmatpush1.msra.mxu0 %v76
    %450 = vmatprep.subr.mxu0 0.0
    %451 = vmatpush1.msra.mxu0 %v77
    %452 = vmatprep.subr.mxu0 0.0
    %453 = vmatpush1.msra.mxu0 %v78
    %454 = vmatprep.subr.mxu0 0.0
    %455 = vmatpush1.msra.mxu0 %v79
    %456 = vmatprep.subr.mxu0 0.0
    %457 = vmatpush1.msra.mxu0 %v80
    %458 = vmatprep.subr.mxu0 0.0
    %459 = vmatpush1.msra.mxu0 %v81
    %460 = vmatprep.mubr.f32.mxu0 %v30
    %461 = vmatmul.mubr.f32.gmra.mrb[0].mxu0 %v29
    %v462 = vpop.f32.mrb[0].mxu0
    %v463 = vadd.f32 %v390, %v462
    %v464 = vpop.f32.mrb[0].mxu0
    %465 = vdwg.mxu0
    %466 = vmatprep.subr.mxu0 0.0
    %467 = vmatpush1.msra.mxu0 %v82
    %468 = vmatprep.subr.mxu0 0.0
    %469 = vmatpush1.msra.mxu0 %v83
    %470 = vmatprep.subr.mxu0 0.0
    %471 = vmatpush1.msra.mxu0 %v84
    %472 = vmatprep.subr.mxu0 0.0
    %473 = vmatpush1.msra.mxu0 %v85
    %474 = vmatprep.subr.mxu0 0.0
    %475 = vmatpush1.msra.mxu0 %v86
    %476 = vmatprep.subr.mxu0 0.0
    %477 = vmatpush1.msra.mxu0 %v87
    %478 = vmatprep.subr.mxu0 0.0
    %479 = vmatpush1.msra.mxu0 %v88
    %480 = vmatprep.subr.mxu0 0.0
    %481 = vmatpush1.msra.mxu0 %v89
    %482 = vmatprep.subr.mxu0 0.0
    %483 = vmatpush1.msra.mxu0 %v90
    %484 = vmatprep.subr.mxu0 0.0
    %485 = vmatpush1.msra.mxu0 %v91
    %486 = vmatprep.subr.mxu0 0.0
    %487 = vmatpush1.msra.mxu0 %v92
    %488 = vmatprep.subr.mxu0 0.0
    %489 = vmatpush1.msra.mxu0 %v93
    %490 = vmatprep.subr.mxu0 0.0
    %491 = vmatpush1.msra.mxu0 %v94
    %492 = vmatprep.subr.mxu0 0.0
    %493 = vmatpush1.msra.mxu0 %v95
    %494 = vmatprep.subr.mxu0 0.0
    %495 = vmatpush1.msra.mxu0 %v96
    %496 = vmatprep.subr.mxu0 0.0
    %497 = vmatpush1.msra.mxu0 %v97
    %498 = vmatprep.subr.mxu0 0.0
    %499 = vmatpush1.msra.mxu0 %v98
    %500 = vmatprep.subr.mxu0 0.0
    %501 = vmatpush1.msra.mxu0 %v99
    %502 = vmatprep.subr.mxu0 0.0
    %503 = vmatpush1.msra.mxu0 %v100
    %504 = vmatprep.subr.mxu0 0.0
    %505 = vmatpush1.msra.mxu0 %v101
    %506 = vmatprep.subr.mxu0 0.0
    %507 = vmatpush1.msra.mxu0 %v102
    %508 = vmatprep.subr.mxu0 0.0
    %509 = vmatpush1.msra.mxu0 %v103
    %510 = vmatprep.subr.mxu0 0.0
    %511 = vmatpush1.msra.mxu0 %v104
    %512 = vmatprep.subr.mxu0 0.0
    %513 = vmatpush1.msra.mxu0 %v105
    %514 = vmatprep.subr.mxu0 0.0
    %515 = vmatpush1.msra.mxu0 %v106
    %516 = vmatprep.subr.mxu0 0.0
    %517 = vmatpush1.msra.mxu0 %v107
    %518 = vmatprep.subr.mxu0 0.0
    %519 = vmatpush1.msra.mxu0 %v108
    %520 = vmatprep.subr.mxu0 0.0
    %521 = vmatpush1.msra.mxu0 %v109
    %522 = vmatprep.subr.mxu0 0.0
    %523 = vmatpush1.msra.mxu0 %v110
    %524 = vmatprep.subr.mxu0 0.0
    %525 = vmatpush1.msra.mxu0 %v111
    %526 = vmatprep.subr.mxu0 0.0
    %527 = vmatpush1.msra.mxu0 %v112
    %528 = vmatprep.subr.mxu0 0.0
    %529 = vmatpush1.msra.mxu0 %v113
    %530 = vmatprep.mubr.f32.mxu0 %v32
    %531 = vmatmul.mubr.f32.gmra.mrb[0].mxu0 %v31
    %v532 = vpop.f32.mrb[0].mxu0
    %v533 = vadd.f32 %v463, %v532
    %v534 = vpop.f32.mrb[0].mxu0
    %535 = vdwg.mxu0
    %536 = vmatprep.subr.mxu0 0.0
    %537 = vmatpush1.msra.mxu0 %v114
    %538 = vmatprep.subr.mxu0 0.0
    %539 = vmatpush1.msra.mxu0 %v115
    %540 = vmatprep.subr.mxu0 0.0
    %541 = vmatpush1.msra.mxu0 %v116
    %542 = vmatprep.subr.mxu0 0.0
    %543 = vmatpush1.msra.mxu0 %v117
    %544 = vmatprep.subr.mxu0 0.0
    %545 = vmatpush1.msra.mxu0 %v118
    %546 = vmatprep.subr.mxu0 0.0
    %547 = vmatpush1.msra.mxu0 %v119
    %548 = vmatprep.subr.mxu0 0.0
    %549 = vmatpush1.msra.mxu0 %v120
    %550 = vmatprep.subr.mxu0 0.0
    %551 = vmatpush1.msra.mxu0 %v121
    %552 = vmatprep.subr.mxu0 0.0
    %553 = vmatpush1.msra.mxu0 %v122
    %554 = vmatprep.subr.mxu0 0.0
    %555 = vmatpush1.msra.mxu0 %v123
    %556 = vmatprep.subr.mxu0 0.0
    %557 = vmatpush1.msra.mxu0 %v124
    %558 = vmatprep.subr.mxu0 0.0
    %559 = vmatpush1.msra.mxu0 %v125
    %560 = vmatprep.subr.mxu0 0.0
    %561 = vmatpush1.msra.mxu0 %v126
    %562 = vmatprep.subr.mxu0 0.0
    %563 = vmatpush1.msra.mxu0 %v127
    %564 = vmatprep.subr.mxu0 0.0
    %565 = vmatpush1.msra.mxu0 %v128
    %566 = vmatprep.subr.mxu0 0.0
    %567 = vmatpush1.msra.mxu0 %v129
    %568 = vmatprep.subr.mxu0 0.0
    %569 = vmatpush1.msra.mxu0 %v130
    %570 = vmatprep.subr.mxu0 0.0
    %571 = vmatpush1.msra.mxu0 %v131
    %572 = vmatprep.subr.mxu0 0.0
    %573 = vmatpush1.msra.mxu0 %v132
    %574 = vmatprep.subr.mxu0 0.0
    %575 = vmatpush1.msra.mxu0 %v133
    %576 = vmatprep.subr.mxu0 0.0
    %577 = vmatpush1.msra.mxu0 %v134
    %578 = vmatprep.subr.mxu0 0.0
    %579 = vmatpush1.msra.mxu0 %v135
    %580 = vmatprep.subr.mxu0 0.0
    %581 = vmatpush1.msra.mxu0 %v136
    %582 = vmatprep.subr.mxu0 0.0
    %583 = vmatpush1.msra.mxu0 %v137
    %584 = vmatprep.subr.mxu0 0.0
    %585 = vmatpush1.msra.mxu0 %v138
    %586 = vmatprep.subr.mxu0 0.0
    %587 = vmatpush1.msra.mxu0 %v139
    %588 = vmatprep.subr.mxu0 0.0
    %589 = vmatpush1.msra.mxu0 %v140
    %590 = vmatprep.subr.mxu0 0.0
    %591 = vmatpush1.msra.mxu0 %v141
    %592 = vmatprep.subr.mxu0 0.0
    %593 = vmatpush1.msra.mxu0 %v142
    %594 = vmatprep.subr.mxu0 0.0
    %595 = vmatpush1.msra.mxu0 %v143
    %596 = vmatprep.subr.mxu0 0.0
    %597 = vmatpush1.msra.mxu0 %v144
    %598 = vmatprep.subr.mxu0 0.0
    %599 = vmatpush1.msra.mxu0 %v145
    %600 = vmatprep.mubr.f32.mxu0 %v34
    %601 = vmatmul.mubr.f32.gmra.mrb[0].mxu0 %v33
    %v602 = vpop.f32.mrb[0].mxu0
    %v603 = vadd.f32 %v533, %v602
    %v604 = vpop.f32.mrb[0].mxu0
    %605 = vdwg.mxu0
    %606 = vmatprep.subr.mxu0 0.0
    %607 = vmatpush1.msra.mxu0 %v146
    %608 = vmatprep.subr.mxu0 0.0
    %609 = vmatpush1.msra.mxu0 %v147
    %610 = vmatprep.subr.mxu0 0.0
    %611 = vmatpush1.msra.mxu0 %v148
    %612 = vmatprep.subr.mxu0 0.0
    %613 = vmatpush1.msra.mxu0 %v149
    %614 = vmatprep.subr.mxu0 0.0
    %615 = vmatpush1.msra.mxu0 %v150
    %616 = vmatprep.subr.mxu0 0.0
    %617 = vmatpush1.msra.mxu0 %v151
    %618 = vmatprep.subr.mxu0 0.0
    %619 = vmatpush1.msra.mxu0 %v152
    %620 = vmatprep.subr.mxu0 0.0
    %621 = vmatpush1.msra.mxu0 %v153
    %622 = vmatprep.subr.mxu0 0.0
    %623 = vmatpush1.msra.mxu0 %v154
    %624 = vmatprep.subr.mxu0 0.0
    %625 = vmatpush1.msra.mxu0 %v155
    %626 = vmatprep.subr.mxu0 0.0
    %627 = vmatpush1.msra.mxu0 %v156
    %628 = vmatprep.subr.mxu0 0.0
    %629 = vmatpush1.msra.mxu0 %v157
    %630 = vmatprep.subr.mxu0 0.0
    %631 = vmatpush1.msra.mxu0 %v158
    %632 = vmatprep.subr.mxu0 0.0
    %633 = vmatpush1.msra.mxu0 %v159
    %634 = vmatprep.subr.mxu0 0.0
    %635 = vmatpush1.msra.mxu0 %v160
    %636 = vmatprep.subr.mxu0 0.0
    %637 = vmatpush1.msra.mxu0 %v161
    %638 = vmatprep.subr.mxu0 0.0
    %639 = vmatpush1.msra.mxu0 %v162
    %640 = vmatprep.subr.mxu0 0.0
    %641 = vmatpush1.msra.mxu0 %v163
    %642 = vmatprep.subr.mxu0 0.0
    %643 = vmatpush1.msra.mxu0 %v164
    %644 = vmatprep.subr.mxu0 0.0
    %645 = vmatpush1.msra.mxu0 %v165
    %646 = vmatprep.subr.mxu0 0.0
    %647 = vmatpush1.msra.mxu0 %v166
    %648 = vmatprep.subr.mxu0 0.0
    %649 = vmatpush1.msra.mxu0 %v167
    %650 = vmatprep.subr.mxu0 0.0
    %651 = vmatpush1.msra.mxu0 %v168
    %652 = vmatprep.subr.mxu0 0.0
    %653 = vmatpush1.msra.mxu0 %v169
    %654 = vmatprep.subr.mxu0 0.0
    %655 = vmatpush1.msra.mxu0 %v170
    %656 = vmatprep.subr.mxu0 0.0
    %657 = vmatpush1.msra.mxu0 %v171
    %658 = vmatprep.subr.mxu0 0.0
    %659 = vmatpush1.msra.mxu0 %v172
    %660 = vmatprep.subr.mxu0 0.0
    %661 = vmatpush1.msra.mxu0 %v173
    %662 = vmatprep.subr.mxu0 0.0
    %663 = vmatpush1.msra.mxu0 %v174
    %664 = vmatprep.subr.mxu0 0.0
    %665 = vmatpush1.msra.mxu0 %v175
    %666 = vmatprep.subr.mxu0 0.0
    %667 = vmatpush1.msra.mxu0 %v176
    %668 = vmatprep.subr.mxu0 0.0
    %669 = vmatpush1.msra.mxu0 %v177
    %670 = vmatprep.mubr.f32.mxu0 %v36
    %671 = vmatmul.mubr.f32.gmra.mrb[0].mxu0 %v35
    %v672 = vpop.f32.mrb[0].mxu0
    %v673 = vadd.f32 %v603, %v672
    %v674 = vpop.f32.mrb[0].mxu0
    %675 = vdwg.mxu0
    %676 = vmatprep.subr.mxu0 0.0
    %677 = vmatpush1.msra.mxu0 %v178
    %678 = vmatprep.subr.mxu0 0.0
    %679 = vmatpush1.msra.mxu0 %v179
    %680 = vmatprep.subr.mxu0 0.0
    %681 = vmatpush1.msra.mxu0 %v180
    %682 = vmatprep.subr.mxu0 0.0
    %683 = vmatpush1.msra.mxu0 %v181
    %684 = vmatprep.subr.mxu0 0.0
    %685 = vmatpush1.msra.mxu0 %v182
    %686 = vmatprep.subr.mxu0 0.0
    %687 = vmatpush1.msra.mxu0 %v183
    %688 = vmatprep.subr.mxu0 0.0
    %689 = vmatpush1.msra.mxu0 %v184
    %690 = vmatprep.subr.mxu0 0.0
    %691 = vmatpush1.msra.mxu0 %v185
    %692 = vmatprep.subr.mxu0 0.0
    %693 = vmatpush1.msra.mxu0 %v186
    %694 = vmatprep.subr.mxu0 0.0
    %695 = vmatpush1.msra.mxu0 %v187
    %696 = vmatprep.subr.mxu0 0.0
    %697 = vmatpush1.msra.mxu0 %v188
    %698 = vmatprep.subr.mxu0 0.0
    %699 = vmatpush1.msra.mxu0 %v189
    %700 = vmatprep.subr.mxu0 0.0
    %701 = vmatpush1.msra.mxu0 %v190
    %702 = vmatprep.subr.mxu0 0.0
    %703 = vmatpush1.msra.mxu0 %v191
    %704 = vmatprep.subr.mxu0 0.0
    %705 = vmatpush1.msra.mxu0 %v192
    %706 = vmatprep.subr.mxu0 0.0
    %707 = vmatpush1.msra.mxu0 %v193
    %708 = vmatprep.subr.mxu0 0.0
    %709 = vmatpush1.msra.mxu0 %v194
    %710 = vmatprep.subr.mxu0 0.0
    %711 = vmatpush1.msra.mxu0 %v195
    %712 = vmatprep.subr.mxu0 0.0
    %713 = vmatpush1.msra.mxu0 %v196
    %714 = vmatprep.subr.mxu0 0.0
    %715 = vmatpush1.msra.mxu0 %v197
    %716 = vmatprep.subr.mxu0 0.0
    %717 = vmatpush1.msra.mxu0 %v198
    %718 = vmatprep.subr.mxu0 0.0
    %719 = vmatpush1.msra.mxu0 %v199
    %720 = vmatprep.subr.mxu0 0.0
    %721 = vmatpush1.msra.mxu0 %v200
    %722 = vmatprep.subr.mxu0 0.0
    %723 = vmatpush1.msra.mxu0 %v201
    %724 = vmatprep.subr.mxu0 0.0
    %725 = vmatpush1.msra.mxu0 %v202
    %726 = vmatprep.subr.mxu0 0.0
    %727 = vmatpush1.msra.mxu0 %v203
    %728 = vmatprep.subr.mxu0 0.0
    %729 = vmatpush1.msra.mxu0 %v204
    %730 = vmatprep.subr.mxu0 0.0
    %731 = vmatpush1.msra.mxu0 %v205
    %732 = vmatprep.subr.mxu0 0.0
    %733 = vmatpush1.msra.mxu0 %v206
    %734 = vmatprep.subr.mxu0 0.0
    %735 = vmatpush1.msra.mxu0 %v207
    %736 = vmatprep.subr.mxu0 0.0
    %737 = vmatpush1.msra.mxu0 %v208
    %738 = vmatprep.subr.mxu0 0.0
    %739 = vmatpush1.msra.mxu0 %v209
    %740 = vmatprep.mubr.f32.mxu0 %v38
    %741 = vmatmul.mubr.f32.gmra.mrb[0].mxu0 %v37
    %v742 = vpop.f32.mrb[0].mxu0
    %v743 = vadd.f32 %v673, %v742
    %v744 = vpop.f32.mrb[0].mxu0
    %745 = vdwg.mxu0
    %746 = vmatprep.subr.mxu0 0.0
    %747 = vmatpush1.msra.mxu0 %v210
    %748 = vmatprep.subr.mxu0 0.0
    %749 = vmatpush1.msra.mxu0 %v211
    %750 = vmatprep.subr.mxu0 0.0
    %751 = vmatpush1.msra.mxu0 %v212
    %752 = vmatprep.subr.mxu0 0.0
    %753 = vmatpush1.msra.mxu0 %v213
    %754 = vmatprep.subr.mxu0 0.0
    %755 = vmatpush1.msra.mxu0 %v214
    %756 = vmatprep.subr.mxu0 0.0
    %757 = vmatpush1.msra.mxu0 %v215
    %758 = vmatprep.subr.mxu0 0.0
    %759 = vmatpush1.msra.mxu0 %v216
    %760 = vmatprep.subr.mxu0 0.0
    %761 = vmatpush1.msra.mxu0 %v217
    %762 = vmatprep.subr.mxu0 0.0
    %763 = vmatpush1.msra.mxu0 %v218
    %764 = vmatprep.subr.mxu0 0.0
    %765 = vmatpush1.msra.mxu0 %v219
    %766 = vmatprep.subr.mxu0 0.0
    %767 = vmatpush1.msra.mxu0 %v220
    %768 = vmatprep.subr.mxu0 0.0
    %769 = vmatpush1.msra.mxu0 %v221
    %770 = vmatprep.subr.mxu0 0.0
    %771 = vmatpush1.msra.mxu0 %v222
    %772 = vmatprep.subr.mxu0 0.0
    %773 = vmatpush1.msra.mxu0 %v223
    %774 = vmatprep.subr.mxu0 0.0
    %775 = vmatpush1.msra.mxu0 %v224
    %776 = vmatprep.subr.mxu0 0.0
    %777 = vmatpush1.msra.mxu0 %v225
    %778 = vmatprep.subr.mxu0 0.0
    %779 = vmatpush1.msra.mxu0 %v226
    %780 = vmatprep.subr.mxu0 0.0
    %781 = vmatpush1.msra.mxu0 %v227
    %782 = vmatprep.subr.mxu0 0.0
    %783 = vmatpush1.msra.mxu0 %v228
    %784 = vmatprep.subr.mxu0 0.0
    %785 = vmatpush1.msra.mxu0 %v229
    %786 = vmatprep.subr.mxu0 0.0
    %787 = vmatpush1.msra.mxu0 %v230
    %788 = vmatprep.subr.mxu0 0.0
    %789 = vmatpush1.msra.mxu0 %v231
    %790 = vmatprep.subr.mxu0 0.0
    %791 = vmatpush1.msra.mxu0 %v232
    %792 = vmatprep.subr.mxu0 0.0
    %793 = vmatpush1.msra.mxu0 %v233
    %794 = vmatprep.subr.mxu0 0.0
    %795 = vmatpush1.msra.mxu0 %v234
    %796 = vmatprep.subr.mxu0 0.0
    %797 = vmatpush1.msra.mxu0 %v235
    %798 = vmatprep.subr.mxu0 0.0
    %799 = vmatpush1.msra.mxu0 %v236
    %800 = vmatprep.subr.mxu0 0.0
    %801 = vmatpush1.msra.mxu0 %v237
    %802 = vmatprep.subr.mxu0 0.0
    %803 = vmatpush1.msra.mxu0 %v238
    %804 = vmatprep.subr.mxu0 0.0
    %805 = vmatpush1.msra.mxu0 %v239
    %806 = vmatprep.subr.mxu0 0.0
    %807 = vmatpush1.msra.mxu0 %v240
    %808 = vmatprep.subr.mxu0 0.0
    %809 = vmatpush1.msra.mxu0 %v241
    %810 = vmatprep.mubr.f32.mxu0 %v40
    %811 = vmatmul.mubr.f32.gmra.mrb[0].mxu0 %v39
    %v812 = vpop.f32.mrb[0].mxu0
    %v813 = vadd.f32 %v743, %v812
    %v814 = vpop.f32.mrb[0].mxu0
    %815 = vdwg.mxu0
    %816 = vmatprep.subr.mxu0 0.0
    %817 = vmatpush1.msra.mxu0 %v242
    %818 = vmatprep.subr.mxu0 0.0
    %819 = vmatpush1.msra.mxu0 %v243
    %820 = vmatprep.subr.mxu0 0.0
    %821 = vmatpush1.msra.mxu0 %v244
    %822 = vmatprep.subr.mxu0 0.0
    %823 = vmatpush1.msra.mxu0 %v245
    %824 = vmatprep.subr.mxu0 0.0
    %825 = vmatpush1.msra.mxu0 %v246
    %826 = vmatprep.subr.mxu0 0.0
    %827 = vmatpush1.msra.mxu0 %v247
    %828 = vmatprep.subr.mxu0 0.0
    %829 = vmatpush1.msra.mxu0 %v248
    %830 = vmatprep.subr.mxu0 0.0
    %831 = vmatpush1.msra.mxu0 %v249
    %832 = vmatprep.subr.mxu0 0.0
    %833 = vmatpush1.msra.mxu0 %v250
    %834 = vmatprep.subr.mxu0 0.0
    %835 = vmatpush1.msra.mxu0 %v251
    %836 = vmatprep.subr.mxu0 0.0
    %837 = vmatpush1.msra.mxu0 %v252
    %838 = vmatprep.subr.mxu0 0.0
    %839 = vmatpush1.msra.mxu0 %v253
    %840 = vmatprep.subr.mxu0 0.0
    %841 = vmatpush1.msra.mxu0 %v254
    %842 = vmatprep.subr.mxu0 0.0
    %843 = vmatpush1.msra.mxu0 %v255
    %844 = vmatprep.subr.mxu0 0.0
    %845 = vmatpush1.msra.mxu0 %v256
    %846 = vmatprep.subr.mxu0 0.0
    %847 = vmatpush1.msra.mxu0 %v257
    %848 = vmatprep.subr.mxu0 0.0
    %849 = vmatpush1.msra.mxu0 %v258
    %850 = vmatprep.subr.mxu0 0.0
    %851 = vmatpush1.msra.mxu0 %v259
    %852 = vmatprep.subr.mxu0 0.0
    %853 = vmatpush1.msra.mxu0 %v260
    %854 = vmatprep.subr.mxu0 0.0
    %855 = vmatpush1.msra.mxu0 %v261
    %856 = vmatprep.subr.mxu0 0.0
    %857 = vmatpush1.msra.mxu0 %v262
    %858 = vmatprep.subr.mxu0 0.0
    %859 = vmatpush1.msra.mxu0 %v263
    %860 = vmatprep.subr.mxu0 0.0
    %861 = vmatpush1.msra.mxu0 %v264
    %862 = vmatprep.subr.mxu0 0.0
    %863 = vmatpush1.msra.mxu0 %v265
    %864 = vmatprep.subr.mxu0 0.0
    %865 = vmatpush1.msra.mxu0 %v266
    %866 = vmatprep.subr.mxu0 0.0
    %867 = vmatpush1.msra.mxu0 %v267
    %868 = vmatprep.subr.mxu0 0.0
    %869 = vmatpush1.msra.mxu0 %v268
    %870 = vmatprep.subr.mxu0 0.0
    %871 = vmatpush1.msra.mxu0 %v269
    %872 = vmatprep.subr.mxu0 0.0
    %873 = vmatpush1.msra.mxu0 %v270
    %874 = vmatprep.subr.mxu0 0.0
    %875 = vmatpush1.msra.mxu0 %v271
    %876 = vmatprep.subr.mxu0 0.0
    %877 = vmatpush1.msra.mxu0 %v272
    %878 = vmatprep.subr.mxu0 0.0
    %879 = vmatpush1.msra.mxu0 %v273
    %880 = vmatprep.mubr.f32.mxu0 %v42
    %881 = vmatmul.mubr.f32.gmra.mrb[0].mxu0 %v41
    %v882 = vpop.f32.mrb[0].mxu0
    %v883 = vadd.f32 %v813, %v882
    %v884 = vpop.f32.mrb[0].mxu0
    %885 = vdwg.mxu0
    %886 = vmatprep.subr.mxu0 0.0
    %887 = vmatpush1.msra.mxu0 %v274
    %888 = vmatprep.subr.mxu0 0.0
    %889 = vmatpush1.msra.mxu0 %v275
    %890 = vmatprep.subr.mxu0 0.0
    %891 = vmatpush1.msra.mxu0 %v276
    %892 = vmatprep.subr.mxu0 0.0
    %893 = vmatpush1.msra.mxu0 %v277
    %894 = vmatprep.subr.mxu0 0.0
    %895 = vmatpush1.msra.mxu0 %v278
    %896 = vmatprep.subr.mxu0 0.0
    %897 = vmatpush1.msra.mxu0 %v279
    %898 = vmatprep.subr.mxu0 0.0
    %899 = vmatpush1.msra.mxu0 %v280
    %900 = vmatprep.subr.mxu0 0.0
    %901 = vmatpush1.msra.mxu0 %v281
    %902 = vmatprep.subr.mxu0 0.0
    %903 = vmatpush1.msra.mxu0 %v282
    %904 = vmatprep.subr.mxu0 0.0
    %905 = vmatpush1.msra.mxu0 %v283
    %906 = vmatprep.subr.mxu0 0.0
    %907 = vmatpush1.msra.mxu0 %v284
    %908 = vmatprep.subr.mxu0 0.0
    %909 = vmatpush1.msra.mxu0 %v285
    %910 = vmatprep.subr.mxu0 0.0
    %911 = vmatpush1.msra.mxu0 %v286
    %912 = vmatprep.subr.mxu0 0.0
    %913 = vmatpush1.msra.mxu0 %v287
    %914 = vmatprep.subr.mxu0 0.0
    %915 = vmatpush1.msra.mxu0 %v288
    %916 = vmatprep.subr.mxu0 0.0
    %917 = vmatpush1.msra.mxu0 %v289
    %918 = vmatprep.subr.mxu0 0.0
    %919 = vmatpush1.msra.mxu0 %v290
    %920 = vmatprep.subr.mxu0 0.0
    %921 = vmatpush1.msra.mxu0 %v291
    %922 = vmatprep.subr.mxu0 0.0
    %923 = vmatpush1.msra.mxu0 %v292
    %924 = vmatprep.subr.mxu0 0.0
    %925 = vmatpush1.msra.mxu0 %v293
    %926 = vmatprep.subr.mxu0 0.0
    %927 = vmatpush1.msra.mxu0 %v294
    %928 = vmatprep.subr.mxu0 0.0
    %929 = vmatpush1.msra.mxu0 %v295
    %930 = vmatprep.subr.mxu0 0.0
    %931 = vmatpush1.msra.mxu0 %v296
    %932 = vmatprep.subr.mxu0 0.0
    %933 = vmatpush1.msra.mxu0 %v297
    %934 = vmatprep.subr.mxu0 0.0
    %935 = vmatpush1.msra.mxu0 %v298
    %936 = vmatprep.subr.mxu0 0.0
    %937 = vmatpush1.msra.mxu0 %v299
    %938 = vmatprep.subr.mxu0 0.0
    %939 = vmatpush1.msra.mxu0 %v300
    %940 = vmatprep.subr.mxu0 0.0
    %941 = vmatpush1.msra.mxu0 %v301
    %942 = vmatprep.subr.mxu0 0.0
    %943 = vmatpush1.msra.mxu0 %v302
    %944 = vmatprep.subr.mxu0 0.0
    %945 = vmatpush1.msra.mxu0 %v303
    %946 = vmatprep.subr.mxu0 0.0
    %947 = vmatpush1.msra.mxu0 %v304
    %948 = vmatprep.subr.mxu0 0.0
    %949 = vmatpush1.msra.mxu0 %v305
    %950 = vmatprep.mubr.f32.mxu0 %v44
    %951 = vmatmul.mubr.f32.gmra.mrb[0].mxu0 %v43
    %v952 = vpop.f32.mrb[0].mxu0
    %v953 = vadd.f32 %v883, %v952
    %v954 = vpop.f32.mrb[0].mxu0
    %955 = vdwg.mxu0
    %956 = vmatprep.subr.mxu0 0.0
    %957 = vmatpush1.msra.mxu0 %v306
    %958 = vmatprep.subr.mxu0 0.0
    %959 = vmatpush1.msra.mxu0 %v307
    %960 = vmatprep.subr.mxu0 0.0
    %961 = vmatpush1.msra.mxu0 %v308
    %962 = vmatprep.subr.mxu0 0.0
    %963 = vmatpush1.msra.mxu0 %v309
    %964 = vmatprep.subr.mxu0 0.0
    %965 = vmatpush1.msra.mxu0 %v310
    %966 = vmatprep.subr.mxu0 0.0
    %967 = vmatpush1.msra.mxu0 %v311
    %968 = vmatprep.subr.mxu0 0.0
    %969 = vmatpush1.msra.mxu0 %v312
    %970 = vmatprep.subr.mxu0 0.0
    %971 = vmatpush1.msra.mxu0 %v313
    %972 = vmatprep.subr.mxu0 0.0
    %973 = vmatpush1.msra.mxu0 %v314
    %974 = vmatprep.subr.mxu0 0.0
    %975 = vmatpush1.msra.mxu0 %v315
    %976 = vmatprep.subr.mxu0 0.0
    %977 = vmatpush1.msra.mxu0 %v316
    %978 = vmatprep.subr.mxu0 0.0
    %979 = vmatpush1.msra.mxu0 %v317
    %980 = vmatprep.subr.mxu0 0.0
    %981 = vmatpush1.msra.mxu0 %v318
    %982 = vmatprep.subr.mxu0 0.0
    %983 = vmatpush1.msra.mxu0 %v319
    %984 = vmatprep.subr.mxu0 0.0
    %985 = vmatpush1.msra.mxu0 %v320
    %986 = vmatprep.subr.mxu0 0.0
    %987 = vmatpush1.msra.mxu0 %v321
    %988 = vmatprep.subr.mxu0 0.0
    %989 = vmatpush1.msra.mxu0 %v322
    %990 = vmatprep.subr.mxu0 0.0
    %991 = vmatpush1.msra.mxu0 %v323
    %992 = vmatprep.subr.mxu0 0.0
    %993 = vmatpush1.msra.mxu0 %v324
    %994 = vmatprep.subr.mxu0 0.0
    %995 = vmatpush1.msra.mxu0 %v325
    %996 = vmatprep.subr.mxu0 0.0
    %997 = vmatpush1.msra.mxu0 %v326
    %998 = vmatprep.subr.mxu0 0.0
    %999 = vmatpush1.msra.mxu0 %v327
    %1000 = vmatprep.subr.mxu0 0.0
    %1001 = vmatpush1.msra.mxu0 %v328
    %1002 = vmatprep.subr.mxu0 0.0
    %1003 = vmatpush1.msra.mxu0 %v329
    %1004 = vmatprep.subr.mxu0 0.0
    %1005 = vmatpush1.msra.mxu0 %v330
    %1006 = vmatprep.subr.mxu0 0.0
    %1007 = vmatpush1.msra.mxu0 %v331
    %1008 = vmatprep.subr.mxu0 0.0
    %1009 = vmatpush1.msra.mxu0 %v332
    %1010 = vmatprep.subr.mxu0 0.0
    %1011 = vmatpush1.msra.mxu0 %v333
    %1012 = vmatprep.subr.mxu0 0.0
    %1013 = vmatpush1.msra.mxu0 %v334
    %1014 = vmatprep.subr.mxu0 0.0
    %1015 = vmatpush1.msra.mxu0 %v335
    %1016 = vmatprep.subr.mxu0 0.0
    %1017 = vmatpush1.msra.mxu0 %v336
    %1018 = vmatprep.subr.mxu0 0.0
    %1019 = vmatpush1.msra.mxu0 %v337
    %1020 = vmatprep.mubr.f32.mxu0 %v46
    %1021 = vmatmul.mubr.f32.gmra.mrb[0].mxu0 %v45
    %v1022 = vpop.f32.mrb[0].mxu0
    %v1023 = vadd.f32 %v953, %v1022
    %v1024 = vpop.f32.mrb[0].mxu0
    %1025 = vdwg.mxu0
    %1026 = vmatprep.subr.mxu0 0.0
    %1027 = vmatpush1.msra.mxu0 %v338
    %1028 = vmatprep.subr.mxu0 0.0
    %1029 = vmatpush1.msra.mxu0 %v339
    %1030 = vmatprep.subr.mxu0 0.0
    %1031 = vmatpush1.msra.mxu0 %v340
    %1032 = vmatprep.subr.mxu0 0.0
    %1033 = vmatpush1.msra.mxu0 %v341
    %1034 = vmatprep.subr.mxu0 0.0
    %1035 = vmatpush1.msra.mxu0 %v342
    %1036 = vmatprep.subr.mxu0 0.0
    %1037 = vmatpush1.msra.mxu0 %v343
    %1038 = vmatprep.subr.mxu0 0.0
    %1039 = vmatpush1.msra.mxu0 %v344
    %1040 = vmatprep.subr.mxu0 0.0
    %1041 = vmatpush1.msra.mxu0 %v345
    %1042 = vmatprep.subr.mxu0 0.0
    %1043 = vmatpush1.msra.mxu0 %v346
    %1044 = vmatprep.subr.mxu0 0.0
    %1045 = vmatpush1.msra.mxu0 %v347
    %1046 = vmatprep.subr.mxu0 0.0
    %1047 = vmatpush1.msra.mxu0 %v348
    %1048 = vmatprep.subr.mxu0 0.0
    %1049 = vmatpush1.msra.mxu0 %v349
    %1050 = vmatprep.subr.mxu0 0.0
    %1051 = vmatpush1.msra.mxu0 %v350
    %1052 = vmatprep.subr.mxu0 0.0
    %1053 = vmatpush1.msra.mxu0 %v351
    %1054 = vmatprep.subr.mxu0 0.0
    %1055 = vmatpush1.msra.mxu0 %v352
    %1056 = vmatprep.subr.mxu0 0.0
    %1057 = vmatpush1.msra.mxu0 %v353
    %1058 = vmatprep.subr.mxu0 0.0
    %1059 = vmatpush1.msra.mxu0 %v354
    %1060 = vmatprep.subr.mxu0 0.0
    %1061 = vmatpush1.msra.mxu0 %v355
    %1062 = vmatprep.subr.mxu0 0.0
    %1063 = vmatpush1.msra.mxu0 %v356
    %1064 = vmatprep.subr.mxu0 0.0
    %1065 = vmatpush1.msra.mxu0 %v357
    %1066 = vmatprep.subr.mxu0 0.0
    %1067 = vmatpush1.msra.mxu0 %v358
    %1068 = vmatprep.subr.mxu0 0.0
    %1069 = vmatpush1.msra.mxu0 %v359
    %1070 = vmatprep.subr.mxu0 0.0
    %1071 = vmatpush1.msra.mxu0 %v360
    %1072 = vmatprep.subr.mxu0 0.0
    %1073 = vmatpush1.msra.mxu0 %v361
    %1074 = vmatprep.subr.mxu0 0.0
    %1075 = vmatpush1.msra.mxu0 %v362
    %1076 = vmatprep.subr.mxu0 0.0
    %1077 = vmatpush1.msra.mxu0 %v363
    %1078 = vmatprep.subr.mxu0 0.0
    %1079 = vmatpush1.msra.mxu0 %v364
    %1080 = vmatprep.subr.mxu0 0.0
    %1081 = vmatpush1.msra.mxu0 %v365
    %1082 = vmatprep.subr.mxu0 0.0
    %1083 = vmatpush1.msra.mxu0 %v366
    %1084 = vmatprep.subr.mxu0 0.0
    %1085 = vmatpush1.msra.mxu0 %v367
    %1086 = vmatprep.subr.mxu0 0.0
    %1087 = vmatpush1.msra.mxu0 %v368
    %1088 = vmatprep.subr.mxu0 0.0
    %1089 = vmatpush1.msra.mxu0 %v369
    %1090 = vmatprep.mubr.f32.mxu0 %v48
    %1091 = vmatmul.mubr.f32.gmra.mrb[0].mxu0 %v47
    %v1092 = vpop.f32.mrb[0].mxu0
    %v1093 = vadd.f32 %v1023, %v1092
    %v1094 = vpop.f32.mrb[0].mxu0
    %1095 = vdwg.mxu0
    %1096 = vmatprep.subr.mxu0 0.0
    %1097 = vmatpush1.msra.mxu0 %v370
    %1098 = vmatprep.subr.mxu0 0.0
    %1099 = vmatpush1.msra.mxu0 %v371
    %1100 = vmatprep.subr.mxu0 0.0
    %1101 = vmatpush1.msra.mxu0 %v372
    %1102 = vmatprep.subr.mxu0 0.0
    %1103 = vmatpush1.msra.mxu0 %v373
    %1104 = vmatprep.subr.mxu0 0.0
    %1105 = vmatpush1.msra.mxu0 %v374
    %1106 = vmatprep.subr.mxu0 0.0
    %1107 = vmatpush1.msra.mxu0 %v375
    %1108 = vmatprep.subr.mxu0 0.0
    %1109 = vmatpush1.msra.mxu0 %v376
    %1110 = vmatprep.subr.mxu0 0.0
    %1111 = vmatpush1.msra.mxu0 %v377
    %1112 = vmatprep.subr.mxu0 0.0
    %1113 = vmatpush1.msra.mxu0 %v378
    %1114 = vmatprep.subr.mxu0 0.0
    %1115 = vmatpush1.msra.mxu0 %v379
    %1116 = vmatprep.subr.mxu0 0.0
    %1117 = vmatpush1.msra.mxu0 %v380
    %1118 = vmatprep.subr.mxu0 0.0
    %1119 = vmatpush1.msra.mxu0 %v381
    %1120 = vmatprep.subr.mxu0 0.0
    %1121 = vmatpush1.msra.mxu0 %v382
    %1122 = vmatprep.subr.mxu0 0.0
    %1123 = vmatpush1.msra.mxu0 %v383
    %1124 = vmatprep.subr.mxu0 0.0
    %1125 = vmatpush1.msra.mxu0 %v384
    %1126 = vmatprep.subr.mxu0 0.0
    %1127 = vmatpush1.msra.mxu0 0.0
    %1128 = vmatprep.subr.mxu0 0.0
    %1129 = vmatpush1.msra.mxu0 0.0
    %1130 = vmatprep.subr.mxu0 0.0
    %1131 = vmatpush1.msra.mxu0 0.0
    %1132 = vmatprep.subr.mxu0 0.0
    %1133 = vmatpush1.msra.mxu0 0.0
    %1134 = vmatprep.subr.mxu0 0.0
    %1135 = vmatpush1.msra.mxu0 0.0
    %1136 = vmatprep.subr.mxu0 0.0
    %1137 = vmatpush1.msra.mxu0 0.0
    %1138 = vmatprep.subr.mxu0 0.0
    %1139 = vmatpush1.msra.mxu0 0.0
    %1140 = vmatprep.subr.mxu0 0.0
    %1141 = vmatpush1.msra.mxu0 0.0
    %1142 = vmatprep.subr.mxu0 0.0
    %1143 = vmatpush1.msra.mxu0 0.0
    %1144 = vmatprep.subr.mxu0 0.0
    %1145 = vmatpush1.msra.mxu0 0.0
    %1146 = vmatprep.subr.mxu0 0.0
    %1147 = vmatpush1.msra.mxu0 0.0
    %1148 = vmatprep.subr.mxu0 0.0
    %1149 = vmatpush1.msra.mxu0 0.0
    %1150 = vmatprep.subr.mxu0 0.0
    %1151 = vmatpush1.msra.mxu0 0.0
    %1152 = vmatprep.subr.mxu0 0.0
    %1153 = vmatpush1.msra.mxu0 0.0
    %1154 = vmatprep.subr.mxu0 0.0
    %1155 = vmatpush1.msra.mxu0 0.0
    %1156 = vmatprep.subr.mxu0 0.0
    %1157 = vmatpush1.msra.mxu0 0.0
    %1158 = vmatprep.subr.mxu0 0.0
    %1159 = vmatpush1.msra.mxu0 0.0
    %1160 = vmatprep.mubr.f32.mxu0 0.0
    %1161 = vmatmul.mubr.f32.gmra.mrb[0].mxu0 %v394
    %v1162 = vpop.f32.mrb[0].mxu0
    %v1163 = vadd.f32 %v1093, %v1162
    %v1164 = vpop.f32.mrb[0].mxu0
    %1165 = vdwg.mxu0
    %v1166 = vmax.f32 %v1163, 0.0
    %v1167 = vld [vmem:[%s3] sm:$0xff]
    %v1168 = vld [vmem:[%s4] sm:$0xff]
    %1170 = vset.pattern.permute.xlu0 0
    %1171 = vperm.xlu0 %1170, %v1168
    %v1172 = vpop.permute.xlu0 %1171
    %vm1174 = vcmask 261120
    %v1176 = vsel %vm1174, %v1167, 0
    %v1179 = vsel %vm1174, %v1166, 0
    %1181 = vmatprep.subr.mxu0 0.0
    %1182 = vmatpush1.xpose.msra.mxu0 %v1179
    %1183 = vmatprep.subr.mxu0 0.0
    %1184 = vmatpush1.xpose.msra.mxu0 0.0
    %1185 = vmatprep.subr.mxu0 0.0
    %1186 = vmatpush1.xpose.msra.mxu0 0.0
    %1187 = vmatprep.subr.mxu0 0.0
    %1188 = vmatpush1.xpose.msra.mxu0 0.0
    %1189 = vmatprep.subr.mxu0 0.0
    %1190 = vmatpush1.xpose.msra.mxu0 0.0
    %1191 = vmatprep.subr.mxu0 0.0
    %1192 = vmatpush1.xpose.msra.mxu0 0.0
    %1193 = vmatprep.subr.mxu0 0.0
    %1194 = vmatpush1.xpose.msra.mxu0 0.0
    %1195 = vmatprep.subr.mxu0 0.0
    %1196 = vmatpush1.xpose.msra.mxu0 0.0
    %1197 = vmatprep.subr.mxu0 0.0
    %1198 = vmatpush1.xpose.msra.mxu0 0.0
    %1199 = vmatprep.subr.mxu0 0.0
    %1200 = vmatpush1.xpose.msra.mxu0 0.0
    %1201 = vmatprep.subr.mxu0 0.0
    %1202 = vmatpush1.xpose.msra.mxu0 0.0
    %1203 = vmatprep.subr.mxu0 0.0
    %1204 = vmatpush1.xpose.msra.mxu0 0.0
    %1205 = vmatprep.subr.mxu0 0.0
    %1206 = vmatpush1.xpose.msra.mxu0 0.0
    %1207 = vmatprep.subr.mxu0 0.0
    %1208 = vmatpush1.xpose.msra.mxu0 0.0
    %1209 = vmatprep.subr.mxu0 0.0
    %1210 = vmatpush1.xpose.msra.mxu0 0.0
    %1211 = vmatprep.subr.mxu0 0.0
    %1212 = vmatpush1.xpose.msra.mxu0 0.0
    %1213 = vmatprep.subr.mxu0 0.0
    %1214 = vmatpush1.xpose.msra.mxu0 0.0
    %1215 = vmatprep.subr.mxu0 0.0
    %1216 = vmatpush1.xpose.msra.mxu0 0.0
    %1217 = vmatprep.subr.mxu0 0.0
    %1218 = vmatpush1.xpose.msra.mxu0 0.0
    %1219 = vmatprep.subr.mxu0 0.0
    %1220 = vmatpush1.xpose.msra.mxu0 0.0
    %1221 = vmatprep.subr.mxu0 0.0
    %1222 = vmatpush1.xpose.msra.mxu0 0.0
    %1223 = vmatprep.subr.mxu0 0.0
    %1224 = vmatpush1.xpose.msra.mxu0 0.0
    %1225 = vmatprep.subr.mxu0 0.0
    %1226 = vmatpush1.xpose.msra.mxu0 0.0
    %1227 = vmatprep.subr.mxu0 0.0
    %1228 = vmatpush1.xpose.msra.mxu0 0.0
    %1229 = vmatprep.subr.mxu0 0.0
    %1230 = vmatpush1.xpose.msra.mxu0 0.0
    %1231 = vmatprep.subr.mxu0 0.0
    %1232 = vmatpush1.xpose.msra.mxu0 0.0
    %1233 = vmatprep.subr.mxu0 0.0
    %1234 = vmatpush1.xpose.msra.mxu0 0.0
    %1235 = vmatprep.subr.mxu0 0.0
    %1236 = vmatpush1.xpose.msra.mxu0 0.0
    %1237 = vmatprep.subr.mxu0 0.0
    %1238 = vmatpush1.xpose.msra.mxu0 0.0
    %1239 = vmatprep.subr.mxu0 0.0
    %1240 = vmatpush1.xpose.msra.mxu0 0.0
    %1241 = vmatprep.subr.mxu0 0.0
    %1242 = vmatpush1.xpose.msra.mxu0 0.0
    %1243 = vmatprep.subr.mxu0 0.0
    %1244 = vmatpush1.xpose.msra.mxu0 0.0
    %1245 = vmatprep.mubr.f32.mxu0 0.0
    %1246 = vmatmul.mubr.f32.gmra.mrb[0].mxu0 %v1176
    %v1247 = vpop.f32.mrb[0].mxu0
    %v1248 = vadd.f32 %v1172, %v1247
    %v1249 = vpop.f32.mrb[0].mxu0
    %1250 = vdwg.mxu0
    %v1251 = vmax.f32 %v1248, 0.0
    %v1252 = vld [vmem:[%s5] sm:$0xff]
    %1254 = vset.pattern.permute.xlu0 0
    %1255 = vperm.xlu0 %1254, %v1252
    %v1256 = vpop.permute.xlu0 %1255
    %v1258 = vmul.f32 %v1251, %v1256
    %vm1259 = vcmask 64512
    %v1260 = vsel %vm1259, %v1258, 0.0
    %v1261 = vrot.slane %v1260, 4
    %v1262 = vadd.f32 %v1260, %v1261
    %v1263 = vrot.slane %v1262, 2
    %v1264 = vadd.f32 %v1262, %v1263
    %v1265 = vrot.slane %v1264, 1
    %v1266 = vadd.f32 %v1264, %v1265
    %v1267 = vld [vmem:[#allocation2] sm:$0x1]
    %1269 = vset.pattern.permute.xlu0 0
    %1270 = vperm.xlu0 %1269, %v1267
    %v1271 = vpop.permute.xlu0 %1270
    %v1273 = vlaneseq
    %v1274 = vshrl.u32 %v1273, 7
    %v1275 = vsub.s32 0, %v1274
    %v1276 = vrot.slane %v1271, %v1275
    %v1277 = vadd.f32 %v1266, %v1276
    %v1278 = vsub.f32 0.0, %v1277
    %v1279 = vmul.f32 %v1278, 1.442695
    %v1280 = vpow.pop %v1279
    %v1281 = vadd.f32 %v1280, 1.0
    %v1282 = vrcp.pop %v1281
    %v1283 = vmul.f32 1.0, %v1282
    %vm1284 = vcmask 57344
    %1285 = vst.msk [vmem:[#allocation3] sm:$0x1] %vm1284, %v1283
    // Predicated region
    $region30: #{tpu_custom_call.1} parent=1 // pred_check
      _
    $region31: #{tpu_custom_call.1} parent=1 // pred_check_branch
      %1287 = sbr.rel (0) target = $region33
    $region32: #{tpu_custom_call.1} parent=1 // pred_region
      %s1289 = ssub.s32 16, 16
      %1290 = vsyncadd [#allocation4], %s1289
      %s1292 = sshll.u32 [#allocation3], 4
      %s1293 = int_to_ptr.vmem [resolvable:$true] %s1292
      %1295 = dma.vmem_to_hbm [thread:$0]  %s1293, 16, %s7, [#allocation4]
    $region33: #{tpu_custom_call.1} parent=1 // pred_fallthru
      _
    // Predicated region
    $region34: #{tpu_custom_call.1} parent=1 // pred_check
      _
    $region35: #{tpu_custom_call.1} parent=1 // pred_check_branch
      %1297 = sbr.rel (0) target = $region37
    $region36: #{tpu_custom_call.1} parent=1 // pred_region
      %1298 = dma.done [#allocation4], 16
    $region37: #{tpu_custom_call.1} parent=1 // pred_fallthru
      _
    %1299 = vsyncpa [#allocation4], 1

</llo_original>
